<compile_context>
chip_gen: v7x
topology: tpu7x:2x2x1
jax: 0.10.0
libtpu: 0.0.40
codegen_flags: <defaults>
</compile_context>

<pallas_src>
import jax
import jax.numpy as jnp
from jax.experimental import pallas as pl
from jax.experimental.pallas import tpu as pltpu


def _cpat_kernel(s_ref, x_ref, y_ref,
                 w1x_ref, b1x_ref, w2x_ref,
                 w1y_ref, b1y_ref, w2y_ref,
                 out_ref):
    inv_coeff = s_ref[0]                 # 1 / r                         (SMEM scalar)
    bias_const = s_ref[1]                # (1/r)*(b2x + b2y) - 1         (SMEM scalar)

    x = x_ref[...]                       # [TB, D] (f32 or bf16 traffic dtype)
    y = y_ref[...]                       # [TB, D]

    # inp_density_param_net(x): Linear -> ReLU -> (VPU mul + lane reduce) => [TB, 1] f32
    hx = jnp.dot(x, w1x_ref[...], preferred_element_type=jnp.float32) + b1x_ref[...]
    fx = jnp.sum(jnp.maximum(hx, 0.0) * w2x_ref[...], axis=1, keepdims=True)

    # outp_density_param_net(y): Linear -> ReLU -> (VPU mul + lane reduce) => [TB, 1] f32
    hy = jnp.dot(y, w1y_ref[...], preferred_element_type=jnp.float32) + b1y_ref[...]
    gy = jnp.sum(jnp.maximum(hy, 0.0) * w2y_ref[...], axis=1, keepdims=True)

    # transport cost: l2-sq over flattened features, accumulated in f32 -> [TB, 1]
    diff = x.astype(jnp.float32) - y.astype(jnp.float32)
    t_cost = jnp.sum(diff * diff, axis=1, keepdims=True)

    # entropy-regularized compatibility
    out_ref[...] = jnp.exp(inv_coeff * (fx + gy - t_cost) + bias_const)


def _vmem_capacity_bytes():
    try:
        return int(pltpu.get_tpu_info().vmem_capacity_bytes)
    except Exception:
        return 64 << 20          # v7x per-core VMEM: safe lower bound for all generations


def _pick_batch_tile(B, D, in_itemsize, sublane, vmem_budget, resident_bytes):
    """Largest batch tile that fits the VMEM budget; prefer tiles that divide B exactly
    (no jnp.pad copy) and give >= 2 (ideally even) grid steps."""
    per_row = 4 * D * in_itemsize + 2 * 4            # x,y double-buffered + f32 out (2 bufs)
    avail = vmem_budget - resident_bytes
    rows = max(avail // per_row, sublane)
    tb_max = int(rows) // sublane * sublane
    tb_max = max(sublane, min(tb_max, 2048))         # diminishing DMA returns past ~2K rows
    b_ceil = -(-B // sublane) * sublane
    tb_max = min(tb_max, b_ceil)

    div_any = None
    div_even = None
    for t in range(tb_max, sublane - 1, -sublane):
        if B % t == 0:
            steps = B // t
            if div_any is None:
                div_any = t
            if div_even is None and steps >= 2 and steps % 2 == 0:
                div_even = t
            if div_any is not None and div_even is not None:
                break
    if div_even is not None and 2 * div_even >= div_any:
        return div_even, False
    if div_any is not None:
        return div_any, False
    return tb_max, True                              # needs zero-padding of the tail


def _build_call(tb, D, HID, b_pad, vmem_limit, cost, single_buffer_weights):
    resident_kw = {"pipeline_mode": pl.Buffered(1)} if single_buffer_weights else {}

    def const0(i):
        return (0, 0)

    in_specs = [
        pl.BlockSpec(memory_space=pltpu.MemorySpace.SMEM),        # [inv_coeff, bias_const]
        pl.BlockSpec((tb, D), lambda i: (i, 0)),                  # x tile (streamed)
        pl.BlockSpec((tb, D), lambda i: (i, 0)),                  # y tile (streamed)
        pl.BlockSpec((D, HID), const0, **resident_kw),            # w1x (VMEM-resident)
        pl.BlockSpec((1, HID), const0, **resident_kw),            # b1x
        pl.BlockSpec((1, HID), const0, **resident_kw),            # w2x
        pl.BlockSpec((D, HID), const0, **resident_kw),            # w1y
        pl.BlockSpec((1, HID), const0, **resident_kw),            # b1y
        pl.BlockSpec((1, HID), const0, **resident_kw),            # w2y
    ]
    return pl.pallas_call(
        _cpat_kernel,
        out_shape=jax.ShapeDtypeStruct((b_pad, 1), jnp.float32),
        grid=(b_pad // tb,),
        in_specs=in_specs,
        out_specs=pl.BlockSpec((tb, 1), lambda i: (i, 0)),
        compiler_params=pltpu.CompilerParams(
            dimension_semantics=("parallel",),
            vmem_limit_bytes=int(vmem_limit)),
        cost_estimate=cost,
    )


def compatibility_forward(x, y, params, coeff):
    """x, y: [B, C, H, W] (NCHW).  Returns [B, 1] compatibility values (f32).

    HBM-traffic dtype = x.dtype: pass bf16 x/y (and bf16 w1x/w1y) to halve input traffic;
    the wrapper never casts x, so there is no hidden full-array copy before the kernel.
    """
    B = x.shape[0]
    xf = x.reshape(B, -1)
    yf = y.reshape(B, -1)
    D = xf.shape[1]
    in_dtype = xf.dtype
    in_itemsize = int(jnp.dtype(in_dtype).itemsize)

    if yf.dtype != in_dtype:
        yf = yf.astype(in_dtype)

    # First-layer weights travel in the traffic dtype; everything else stays f32.
    w1x = params["w1x"] if params["w1x"].dtype == in_dtype else params["w1x"].astype(in_dtype)
    w1y = params["w1y"] if params["w1y"].dtype == in_dtype else params["w1y"].astype(in_dtype)
    b1x = params["b1x"].astype(jnp.float32).reshape(1, -1)
    b1y = params["b1y"].astype(jnp.float32).reshape(1, -1)
    w2x = params["w2x"].astype(jnp.float32).reshape(1, -1)
    w2y = params["w2y"].astype(jnp.float32).reshape(1, -1)
    HID = w1x.shape[1]

    # SMEM scalars: 1/r and the folded (1/r)*(b2x+b2y) - 1 (no recompile if they change).
    inv_coeff = jnp.reshape(1.0 / jnp.asarray(coeff, jnp.float32), ())
    b2 = (jnp.reshape(params["b2x"], ()) + jnp.reshape(params["b2y"], ())).astype(jnp.float32)
    scalars = jnp.stack([inv_coeff, inv_coeff * b2 - jnp.float32(1.0)])

    # --- tile sizing from an explicit per-generation VMEM budget -------------------------
    sublane = 8 if in_itemsize >= 4 else (16 if in_itemsize == 2 else 32)
    vmem_cap = _vmem_capacity_bytes()
    budget = min(int(vmem_cap * 0.70), 96 << 20)
    # Resident weights assumed double-buffered (conservative even with Buffered(1)).
    resident_bytes = 2 * (2 * D * HID * in_itemsize) + 4 * (2 * HID * 4) + 256
    tb, need_pad = _pick_batch_tile(B, D, in_itemsize, sublane, budget, resident_bytes)

    if need_pad:
        b_pad = -(-B // tb) * tb
        pad = b_pad - B
        xf = jnp.pad(xf, ((0, pad), (0, 0)))
        yf = jnp.pad(yf, ((0, pad), (0, 0)))
    else:
        b_pad = B

    working_set = 4 * tb * D * in_itemsize + resident_bytes + 4 * tb * 4
    vmem_limit = min(int(vmem_cap * 0.85), max(working_set + (8 << 20), 32 << 20))

    cost = pl.CostEstimate(
        flops=int(4 * b_pad * D * HID + 6 * b_pad * D),
        transcendentals=int(b_pad),
        bytes_accessed=int(2 * b_pad * D * in_itemsize
                           + 2 * D * HID * in_itemsize
                           + 8 * HID * 4
                           + b_pad * 4),
    )

    args = (scalars, xf, yf, w1x, b1x, w2x, w1y, b1y, w2y)
    try:
        out = _build_call(tb, D, HID, b_pad, vmem_limit, cost,
                          single_buffer_weights=True)(*args)
    except Exception:
        # Fallback for toolchains that reject pipeline_mode=pl.Buffered(1); the budget
        # already assumed double-buffered weights, so the working set still fits.
        out = _build_call(tb, D, HID, b_pad, vmem_limit, cost,
                          single_buffer_weights=False)(*args)

    return out[:B] if need_pad else out


def _reference_forward(x, y, params, coeff):
    """Pure-JAX reference.  Quantization (if any) is whatever dtype the caller passed in,
    matching the kernel's traffic dtype."""
    B = x.shape[0]
    f32 = jnp.float32
    xf = x.reshape(B, -1).astype(f32)
    yf = y.reshape(B, -1).astype(f32)
    w1x = params["w1x"].astype(f32)
    w1y = params["w1y"].astype(f32)
    fx = (jnp.maximum(xf @ w1x + params["b1x"].astype(f32), 0.0)
          @ params["w2x"].astype(f32) + params["b2x"].astype(f32))
    gy = (jnp.maximum(yf @ w1y + params["b1y"].astype(f32), 0.0)
          @ params["w2y"].astype(f32) + params["b2y"].astype(f32))
    cst = jnp.sum((xf - yf) ** 2, axis=1, keepdims=True)
    return jnp.exp((1.0 / coeff) * (fx + gy - cst) - 1.0)


if __name__ == "__main__":
    # Small shapes consistent with the module's NCHW convention.
    B, C, H, W = 16, 4, 16, 16
    D = C * H * W
    HID = 32
    COEFF = 4.0  # config.transport.coeff (r)

    key = jax.random.PRNGKey(0)
    keys = jax.random.split(key, 10)

    scale1 = 1.0 / jnp.sqrt(D)
    scale2 = 1.0 / jnp.sqrt(HID)
    params = {
        "w1x": jax.random.normal(keys[0], (D, HID), jnp.float32) * scale1,
        "b1x": jax.random.normal(keys[1], (1, HID), jnp.float32) * 0.01,
        "w2x": jax.random.normal(keys[2], (HID, 1), jnp.float32) * scale2,
        "b2x": jax.random.normal(keys[3], (1, 1), jnp.float32) * 0.01,
        "w1y": jax.random.normal(keys[4], (D, HID), jnp.float32) * scale1,
        "b1y": jax.random.normal(keys[5], (1, HID), jnp.float32) * 0.01,
        "w2y": jax.random.normal(keys[6], (HID, 1), jnp.float32) * scale2,
        "b2y": jax.random.normal(keys[7], (1, 1), jnp.float32) * 0.01,
    }

    x = jax.random.normal(keys[8], (B, C, H, W), jnp.float32) * 0.1
    y = x + jax.random.normal(keys[9], (B, C, H, W), jnp.float32) * 0.05

    # f32 run: strict check against the PyTorch-equivalent math (2 batch tiles, no pad).
    out_f32 = jax.block_until_ready(compatibility_forward(x, y, params, COEFF))
    ref_f32 = _reference_forward(x, y, params, COEFF)
    assert out_f32.shape == (B, 1)
    assert jnp.allclose(out_f32, ref_f32, rtol=1e-4, atol=1e-5), (out_f32, ref_f32)

    # bf16-traffic run: inputs and first-layer weights are cast *upstream* (no hidden
    # wrapper copy); kernel keeps f32 MXU accumulation and an f32 L2-sq cost.
    params_bf16 = dict(params,
                       w1x=params["w1x"].astype(jnp.bfloat16),
                       w1y=params["w1y"].astype(jnp.bfloat16))
    x_bf = x.astype(jnp.bfloat16)
    y_bf = y.astype(jnp.bfloat16)
    out_bf16 = jax.block_until_ready(compatibility_forward(x_bf, y_bf, params_bf16, COEFF))
    ref_bf16 = _reference_forward(x_bf, y_bf, params_bf16, COEFF)
    assert jnp.allclose(out_bf16, ref_bf16, rtol=5e-3, atol=1e-3), (out_bf16, ref_bf16)

    print("KERNEL_OK")
</pallas_src>

<mosaic_0001>
module attributes {stable_mosaic.version = 11 : i64} {
  func.func @_cpat_kernel(%arg0: i32, %arg1: memref<2xf32, #tpu.memory_space<smem>>, %arg2: memref<8x1024xf32, #tpu.memory_space<vmem>>, %arg3: memref<8x1024xf32, #tpu.memory_space<vmem>>, %arg4: memref<1024x32xf32, #tpu.memory_space<vmem>>, %arg5: memref<1x32xf32, #tpu.memory_space<vmem>>, %arg6: memref<1x32xf32, #tpu.memory_space<vmem>>, %arg7: memref<1024x32xf32, #tpu.memory_space<vmem>>, %arg8: memref<1x32xf32, #tpu.memory_space<vmem>>, %arg9: memref<1x32xf32, #tpu.memory_space<vmem>>, %arg10: memref<8x1xf32, #tpu.memory_space<vmem>>) attributes {dimension_semantics = [#tpu.dimension_semantics<parallel>], iteration_bounds = array<i64: 2>, scalar_prefetch = 0 : i64, scratch_operands = 0 : i64, tpu.core_type = #tpu.core_type<tc>, window_params = [{transform_indices = @transform_0, window_bounds = array<i64: 2>}, {transform_indices = @transform_1, window_bounds = array<i64: 8, 1024>}, {transform_indices = @transform_2, window_bounds = array<i64: 8, 1024>}, {pipeline_mode = #tpu.pipeline_mode<synchronous>, transform_indices = @transform_3, window_bounds = array<i64: 1024, 32>}, {pipeline_mode = #tpu.pipeline_mode<synchronous>, transform_indices = @transform_4, window_bounds = array<i64: 1, 32>}, {pipeline_mode = #tpu.pipeline_mode<synchronous>, transform_indices = @transform_5, window_bounds = array<i64: 1, 32>}, {pipeline_mode = #tpu.pipeline_mode<synchronous>, transform_indices = @transform_6, window_bounds = array<i64: 1024, 32>}, {pipeline_mode = #tpu.pipeline_mode<synchronous>, transform_indices = @transform_7, window_bounds = array<i64: 1, 32>}, {pipeline_mode = #tpu.pipeline_mode<synchronous>, transform_indices = @transform_8, window_bounds = array<i64: 1, 32>}, {transform_indices = @transform_9, window_bounds = array<i64: 8, 1>}]} {
    %c0 = arith.constant 0 : index
    %0 = memref.load %arg1[%c0] : memref<2xf32, #tpu.memory_space<smem>>
    %c1 = arith.constant 1 : index
    %1 = memref.load %arg1[%c1] : memref<2xf32, #tpu.memory_space<smem>>
    %c0_0 = arith.constant 0 : index
    %c0_1 = arith.constant 0 : index
    %2 = vector.load %arg2[%c0_0, %c0_1] : memref<8x1024xf32, #tpu.memory_space<vmem>>, vector<8x1024xf32>
    %c0_2 = arith.constant 0 : index
    %c0_3 = arith.constant 0 : index
    %3 = vector.load %arg3[%c0_2, %c0_3] : memref<8x1024xf32, #tpu.memory_space<vmem>>, vector<8x1024xf32>
    %c0_4 = arith.constant 0 : index
    %c0_5 = arith.constant 0 : index
    %4 = vector.load %arg4[%c0_4, %c0_5] : memref<1024x32xf32, #tpu.memory_space<vmem>>, vector<1024x32xf32>
    %cst = arith.constant dense<0.000000e+00> : vector<8x32xf32>
    %5 = tpu.matmul %2, %4, %cst {dimension_numbers = #tpu.dot_dimension_numbers<[1], [0], [0], [1], [0, 0, 1, 1], [], []>} : vector<8x1024xf32>, vector<1024x32xf32>, vector<8x32xf32> -> vector<8x32xf32>
    %c0_6 = arith.constant 0 : index
    %c0_7 = arith.constant 0 : index
    %6 = vector.load %arg5[%c0_6, %c0_7] : memref<1x32xf32, #tpu.memory_space<vmem>>, vector<1x32xf32>
    %7 = vector.broadcast %6 : vector<1x32xf32> to vector<8x32xf32>
    %8 = arith.addf %5, %7 : vector<8x32xf32>
    %cst_8 = arith.constant 0.000000e+00 : f32
    %9 = vector.broadcast %cst_8 : f32 to vector<8x32xf32>
    %10 = arith.maximumf %8, %9 : vector<8x32xf32>
    %c0_9 = arith.constant 0 : index
    %c0_10 = arith.constant 0 : index
    %11 = vector.load %arg6[%c0_9, %c0_10] : memref<1x32xf32, #tpu.memory_space<vmem>>, vector<1x32xf32>
    %12 = vector.broadcast %11 : vector<1x32xf32> to vector<8x32xf32>
    %13 = arith.mulf %10, %12 : vector<8x32xf32>
    %cst_11 = arith.constant dense<0.000000e+00> : vector<8xf32>
    %14 = vector.multi_reduction <add>, %13, %cst_11 [1] : vector<8x32xf32> to vector<8xf32>
    %15 = vector.shape_cast %14 : vector<8xf32> to vector<8x1xf32>
    %c0_12 = arith.constant 0 : index
    %c0_13 = arith.constant 0 : index
    %16 = vector.load %arg7[%c0_12, %c0_13] : memref<1024x32xf32, #tpu.memory_space<vmem>>, vector<1024x32xf32>
    %cst_14 = arith.constant dense<0.000000e+00> : vector<8x32xf32>
    %17 = tpu.matmul %3, %16, %cst_14 {dimension_numbers = #tpu.dot_dimension_numbers<[1], [0], [0], [1], [0, 0, 1, 1], [], []>} : vector<8x1024xf32>, vector<1024x32xf32>, vector<8x32xf32> -> vector<8x32xf32>
    %c0_15 = arith.constant 0 : index
    %c0_16 = arith.constant 0 : index
    %18 = vector.load %arg8[%c0_15, %c0_16] : memref<1x32xf32, #tpu.memory_space<vmem>>, vector<1x32xf32>
    %19 = vector.broadcast %18 : vector<1x32xf32> to vector<8x32xf32>
    %20 = arith.addf %17, %19 : vector<8x32xf32>
    %cst_17 = arith.constant 0.000000e+00 : f32
    %21 = vector.broadcast %cst_17 : f32 to vector<8x32xf32>
    %22 = arith.maximumf %20, %21 : vector<8x32xf32>
    %c0_18 = arith.constant 0 : index
    %c0_19 = arith.constant 0 : index
    %23 = vector.load %arg9[%c0_18, %c0_19] : memref<1x32xf32, #tpu.memory_space<vmem>>, vector<1x32xf32>
    %24 = vector.broadcast %23 : vector<1x32xf32> to vector<8x32xf32>
    %25 = arith.mulf %22, %24 : vector<8x32xf32>
    %cst_20 = arith.constant dense<0.000000e+00> : vector<8xf32>
    %26 = vector.multi_reduction <add>, %25, %cst_20 [1] : vector<8x32xf32> to vector<8xf32>
    %27 = vector.shape_cast %26 : vector<8xf32> to vector<8x1xf32>
    %28 = arith.subf %2, %3 : vector<8x1024xf32>
    %29 = arith.mulf %28, %28 : vector<8x1024xf32>
    %cst_21 = arith.constant dense<0.000000e+00> : vector<8xf32>
    %30 = vector.multi_reduction <add>, %29, %cst_21 [1] : vector<8x1024xf32> to vector<8xf32>
    %31 = vector.shape_cast %30 : vector<8xf32> to vector<8x1xf32>
    %32 = arith.addf %15, %27 : vector<8x1xf32>
    %33 = arith.subf %32, %31 : vector<8x1xf32>
    %34 = vector.broadcast %0 : f32 to vector<8x1xf32>
    %35 = arith.mulf %34, %33 : vector<8x1xf32>
    %36 = vector.broadcast %1 : f32 to vector<8x1xf32>
    %37 = arith.addf %35, %36 : vector<8x1xf32>
    %38 = math.exp %37 : vector<8x1xf32>
    %c0_22 = arith.constant 0 : index
    %c0_23 = arith.constant 0 : index
    %39 = vector.load %arg10[%c0_22, %c0_23] : memref<8x1xf32, #tpu.memory_space<vmem>>, vector<8x1xf32>
    tpu.vector_store %arg10[%c0_22, %c0_23], %38 {strides = array<i32>} : memref<8x1xf32, #tpu.memory_space<vmem>>, vector<8x1xf32>,
    return
  }
  func.func @transform_0(%arg0: i32) -> i32 {
    %c0_i32 = arith.constant 0 : i32
    %c0_i32_0 = arith.constant 0 : i32
    return %c0_i32 : i32
  }
  func.func @transform_1(%arg0: i32) -> (i32, i32) {
    %c0_i32 = arith.constant 0 : i32
    %c0_i32_0 = arith.constant 0 : i32
    return %arg0, %c0_i32 : i32, i32
  }
  func.func @transform_2(%arg0: i32) -> (i32, i32) {
    %c0_i32 = arith.constant 0 : i32
    %c0_i32_0 = arith.constant 0 : i32
    return %arg0, %c0_i32 : i32, i32
  }
  func.func @transform_3(%arg0: i32) -> (i32, i32) {
    %c0_i32 = arith.constant 0 : i32
    %c0_i32_0 = arith.constant 0 : i32
    %c0_i32_1 = arith.constant 0 : i32
    return %c0_i32, %c0_i32_0 : i32, i32
  }
  func.func @transform_4(%arg0: i32) -> (i32, i32) {
    %c0_i32 = arith.constant 0 : i32
    %c0_i32_0 = arith.constant 0 : i32
    %c0_i32_1 = arith.constant 0 : i32
    return %c0_i32, %c0_i32_0 : i32, i32
  }
  func.func @transform_5(%arg0: i32) -> (i32, i32) {
    %c0_i32 = arith.constant 0 : i32
    %c0_i32_0 = arith.constant 0 : i32
    %c0_i32_1 = arith.constant 0 : i32
    return %c0_i32, %c0_i32_0 : i32, i32
  }
  func.func @transform_6(%arg0: i32) -> (i32, i32) {
    %c0_i32 = arith.constant 0 : i32
    %c0_i32_0 = arith.constant 0 : i32
    %c0_i32_1 = arith.constant 0 : i32
    return %c0_i32, %c0_i32_0 : i32, i32
  }
  func.func @transform_7(%arg0: i32) -> (i32, i32) {
    %c0_i32 = arith.constant 0 : i32
    %c0_i32_0 = arith.constant 0 : i32
    %c0_i32_1 = arith.constant 0 : i32
    return %c0_i32, %c0_i32_0 : i32, i32
  }
  func.func @transform_8(%arg0: i32) -> (i32, i32) {
    %c0_i32 = arith.constant 0 : i32
    %c0_i32_0 = arith.constant 0 : i32
    %c0_i32_1 = arith.constant 0 : i32
    return %c0_i32, %c0_i32_0 : i32, i32
  }
  func.func @transform_9(%arg0: i32) -> (i32, i32) {
    %c0_i32 = arith.constant 0 : i32
    %c0_i32_0 = arith.constant 0 : i32
    return %arg0, %c0_i32 : i32, i32
  }
}

module attributes {stable_mosaic.version = 11 : i64} {
  func.func @_cpat_kernel(%arg0: i32, %arg1: memref<2xf32, #tpu.memory_space<smem>>, %arg2: memref<8x1024xf32, #tpu.memory_space<vmem>>, %arg3: memref<8x1024xf32, #tpu.memory_space<vmem>>, %arg4: memref<1024x32xf32, #tpu.memory_space<vmem>>, %arg5: memref<1x32xf32, #tpu.memory_space<vmem>>, %arg6: memref<1x32xf32, #tpu.memory_space<vmem>>, %arg7: memref<1024x32xf32, #tpu.memory_space<vmem>>, %arg8: memref<1x32xf32, #tpu.memory_space<vmem>>, %arg9: memref<1x32xf32, #tpu.memory_space<vmem>>, %arg10: memref<8x1xf32, #tpu.memory_space<vmem>>) attributes {dimension_semantics = [#tpu.dimension_semantics<parallel>], iteration_bounds = array<i64: 2>, scalar_prefetch = 0 : i64, scratch_operands = 0 : i64, tpu.core_type = #tpu.core_type<tc>, window_params = [{transform_indices = @transform_0, window_bounds = array<i64: 2>}, {transform_indices = @transform_1, window_bounds = array<i64: 8, 1024>}, {transform_indices = @transform_2, window_bounds = array<i64: 8, 1024>}, {pipeline_mode = #tpu.pipeline_mode<synchronous>, transform_indices = @transform_3, window_bounds = array<i64: 1024, 32>}, {pipeline_mode = #tpu.pipeline_mode<synchronous>, transform_indices = @transform_4, window_bounds = array<i64: 1, 32>}, {pipeline_mode = #tpu.pipeline_mode<synchronous>, transform_indices = @transform_5, window_bounds = array<i64: 1, 32>}, {pipeline_mode = #tpu.pipeline_mode<synchronous>, transform_indices = @transform_6, window_bounds = array<i64: 1024, 32>}, {pipeline_mode = #tpu.pipeline_mode<synchronous>, transform_indices = @transform_7, window_bounds = array<i64: 1, 32>}, {pipeline_mode = #tpu.pipeline_mode<synchronous>, transform_indices = @transform_8, window_bounds = array<i64: 1, 32>}, {transform_indices = @transform_9, window_bounds = array<i64: 8, 1>}]} {
    %c0 = arith.constant 0 : index
    %0 = memref.load %arg1[%c0] : memref<2xf32, #tpu.memory_space<smem>>
    %c1 = arith.constant 1 : index
    %1 = memref.load %arg1[%c1] : memref<2xf32, #tpu.memory_space<smem>>
    %c0_0 = arith.constant 0 : index
    %c0_1 = arith.constant 0 : index
    %2 = vector.load %arg2[%c0_0, %c0_1] : memref<8x1024xf32, #tpu.memory_space<vmem>>, vector<8x1024xf32>
    %c0_2 = arith.constant 0 : index
    %c0_3 = arith.constant 0 : index
    %3 = vector.load %arg3[%c0_2, %c0_3] : memref<8x1024xf32, #tpu.memory_space<vmem>>, vector<8x1024xf32>
    %c0_4 = arith.constant 0 : index
    %c0_5 = arith.constant 0 : index
    %4 = vector.load %arg4[%c0_4, %c0_5] : memref<1024x32xf32, #tpu.memory_space<vmem>>, vector<1024x32xf32>
    %cst = arith.constant dense<0.000000e+00> : vector<8x32xf32>
    %5 = tpu.matmul %2, %4, %cst {dimension_numbers = #tpu.dot_dimension_numbers<[1], [0], [0], [1], [0, 0, 1, 1], [], []>} : vector<8x1024xf32>, vector<1024x32xf32>, vector<8x32xf32> -> vector<8x32xf32>
    %c0_6 = arith.constant 0 : index
    %c0_7 = arith.constant 0 : index
    %6 = vector.load %arg5[%c0_6, %c0_7] : memref<1x32xf32, #tpu.memory_space<vmem>>, vector<1x32xf32>
    %7 = vector.broadcast %6 : vector<1x32xf32> to vector<8x32xf32>
    %8 = arith.addf %5, %7 : vector<8x32xf32>
    %cst_8 = arith.constant 0.000000e+00 : f32
    %9 = vector.broadcast %cst_8 : f32 to vector<8x32xf32>
    %10 = arith.maximumf %8, %9 : vector<8x32xf32>
    %c0_9 = arith.constant 0 : index
    %c0_10 = arith.constant 0 : index
    %11 = vector.load %arg6[%c0_9, %c0_10] : memref<1x32xf32, #tpu.memory_space<vmem>>, vector<1x32xf32>
    %12 = vector.broadcast %11 : vector<1x32xf32> to vector<8x32xf32>
    %13 = arith.mulf %10, %12 : vector<8x32xf32>
    %cst_11 = arith.constant dense<0.000000e+00> : vector<8xf32>
    %14 = vector.multi_reduction <add>, %13, %cst_11 [1] : vector<8x32xf32> to vector<8xf32>
    %15 = vector.shape_cast %14 : vector<8xf32> to vector<8x1xf32>
    %c0_12 = arith.constant 0 : index
    %c0_13 = arith.constant 0 : index
    %16 = vector.load %arg7[%c0_12, %c0_13] : memref<1024x32xf32, #tpu.memory_space<vmem>>, vector<1024x32xf32>
    %cst_14 = arith.constant dense<0.000000e+00> : vector<8x32xf32>
    %17 = tpu.matmul %3, %16, %cst_14 {dimension_numbers = #tpu.dot_dimension_numbers<[1], [0], [0], [1], [0, 0, 1, 1], [], []>} : vector<8x1024xf32>, vector<1024x32xf32>, vector<8x32xf32> -> vector<8x32xf32>
    %c0_15 = arith.constant 0 : index
    %c0_16 = arith.constant 0 : index
    %18 = vector.load %arg8[%c0_15, %c0_16] : memref<1x32xf32, #tpu.memory_space<vmem>>, vector<1x32xf32>
    %19 = vector.broadcast %18 : vector<1x32xf32> to vector<8x32xf32>
    %20 = arith.addf %17, %19 : vector<8x32xf32>
    %cst_17 = arith.constant 0.000000e+00 : f32
    %21 = vector.broadcast %cst_17 : f32 to vector<8x32xf32>
    %22 = arith.maximumf %20, %21 : vector<8x32xf32>
    %c0_18 = arith.constant 0 : index
    %c0_19 = arith.constant 0 : index
    %23 = vector.load %arg9[%c0_18, %c0_19] : memref<1x32xf32, #tpu.memory_space<vmem>>, vector<1x32xf32>
    %24 = vector.broadcast %23 : vector<1x32xf32> to vector<8x32xf32>
    %25 = arith.mulf %22, %24 : vector<8x32xf32>
    %cst_20 = arith.constant dense<0.000000e+00> : vector<8xf32>
    %26 = vector.multi_reduction <add>, %25, %cst_20 [1] : vector<8x32xf32> to vector<8xf32>
    %27 = vector.shape_cast %26 : vector<8xf32> to vector<8x1xf32>
    %28 = arith.subf %2, %3 : vector<8x1024xf32>
    %29 = arith.mulf %28, %28 : vector<8x1024xf32>
    %cst_21 = arith.constant dense<0.000000e+00> : vector<8xf32>
    %30 = vector.multi_reduction <add>, %29, %cst_21 [1] : vector<8x1024xf32> to vector<8xf32>
    %31 = vector.shape_cast %30 : vector<8xf32> to vector<8x1xf32>
    %32 = arith.addf %15, %27 : vector<8x1xf32>
    %33 = arith.subf %32, %31 : vector<8x1xf32>
    %34 = vector.broadcast %0 : f32 to vector<8x1xf32>
    %35 = arith.mulf %34, %33 : vector<8x1xf32>
    %36 = vector.broadcast %1 : f32 to vector<8x1xf32>
    %37 = arith.addf %35, %36 : vector<8x1xf32>
    %38 = math.exp %37 : vector<8x1xf32>
    %c0_22 = arith.constant 0 : index
    %c0_23 = arith.constant 0 : index
    %39 = vector.load %arg10[%c0_22, %c0_23] : memref<8x1xf32, #tpu.memory_space<vmem>>, vector<8x1xf32>
    tpu.vector_store %arg10[%c0_22, %c0_23], %38 {strides = array<i32>} : memref<8x1xf32, #tpu.memory_space<vmem>>, vector<8x1xf32>,
    return
  }
  func.func @transform_0(%arg0: i32) -> i32 {
    %c0_i32 = arith.constant 0 : i32
    %c0_i32_0 = arith.constant 0 : i32
    return %c0_i32 : i32
  }
  func.func @transform_1(%arg0: i32) -> (i32, i32) {
    %c0_i32 = arith.constant 0 : i32
    %c0_i32_0 = arith.constant 0 : i32
    return %arg0, %c0_i32 : i32, i32
  }
  func.func @transform_2(%arg0: i32) -> (i32, i32) {
    %c0_i32 = arith.constant 0 : i32
    %c0_i32_0 = arith.constant 0 : i32
    return %arg0, %c0_i32 : i32, i32
  }
  func.func @transform_3(%arg0: i32) -> (i32, i32) {
    %c0_i32 = arith.constant 0 : i32
    %c0_i32_0 = arith.constant 0 : i32
    %c0_i32_1 = arith.constant 0 : i32
    return %c0_i32, %c0_i32_0 : i32, i32
  }
  func.func @transform_4(%arg0: i32) -> (i32, i32) {
    %c0_i32 = arith.constant 0 : i32
    %c0_i32_0 = arith.constant 0 : i32
    %c0_i32_1 = arith.constant 0 : i32
    return %c0_i32, %c0_i32_0 : i32, i32
  }
  func.func @transform_5(%arg0: i32) -> (i32, i32) {
    %c0_i32 = arith.constant 0 : i32
    %c0_i32_0 = arith.constant 0 : i32
    %c0_i32_1 = arith.constant 0 : i32
    return %c0_i32, %c0_i32_0 : i32, i32
  }
  func.func @transform_6(%arg0: i32) -> (i32, i32) {
    %c0_i32 = arith.constant 0 : i32
    %c0_i32_0 = arith.constant 0 : i32
    %c0_i32_1 = arith.constant 0 : i32
    return %c0_i32, %c0_i32_0 : i32, i32
  }
  func.func @transform_7(%arg0: i32) -> (i32, i32) {
    %c0_i32 = arith.constant 0 : i32
    %c0_i32_0 = arith.constant 0 : i32
    %c0_i32_1 = arith.constant 0 : i32
    return %c0_i32, %c0_i32_0 : i32, i32
  }
  func.func @transform_8(%arg0: i32) -> (i32, i32) {
    %c0_i32 = arith.constant 0 : i32
    %c0_i32_0 = arith.constant 0 : i32
    %c0_i32_1 = arith.constant 0 : i32
    return %c0_i32, %c0_i32_0 : i32, i32
  }
  func.func @transform_9(%arg0: i32) -> (i32, i32) {
    %c0_i32 = arith.constant 0 : i32
    %c0_i32_0 = arith.constant 0 : i32
    return %arg0, %c0_i32 : i32, i32
  }
}

</mosaic_0001>

<llo_original>
// kernel: tpu_custom_call.1
$region0: #{tpu_custom_call.1}
  #allocation0 [shape = 'u32[]', space=smem, size = 0x4, offset = 0x4, fixed_abs, tag = 'smem constant byte address 0x4 - core index']
  #allocation1 [shape = 'u32[144,128]{1,0:T(1,128)}', space=vmem, size = 0x12000, scoped, tag = 'internal scratch']
  %s0 = inlined_call_operand.vmem [shape: f32[2], index: 0, kind: input, shape index: {}]
  %s1 = inlined_call_operand.vmem [shape: f32[16,1024], index: 1, kind: input, shape index: {}]
  %s2 = inlined_call_operand.vmem [shape: f32[16,1024], index: 2, kind: input, shape index: {}]
  %s3 = inlined_call_operand.vmem [shape: f32[1024,32], index: 3, kind: input, shape index: {}]
  %s4 = inlined_call_operand.vmem [shape: f32[1,32], index: 4, kind: input, shape index: {}]
  %s5 = inlined_call_operand.vmem [shape: f32[1,32], index: 5, kind: input, shape index: {}]
  %s6 = inlined_call_operand.vmem [shape: f32[1024,32], index: 6, kind: input, shape index: {}]
  %s7 = inlined_call_operand.vmem [shape: f32[1,32], index: 7, kind: input, shape index: {}]
  %s8 = inlined_call_operand.vmem [shape: f32[1,32], index: 8, kind: input, shape index: {}]
  %s9 = inlined_call_operand.vmem [shape: f32[16,1], index: 9, kind: output, shape index: {}]
  %s10 = sld [smem:[#allocation0]]
  $region73: #{tpu_custom_call.1} parent=0
    _
  %s12 = ssub.s32 1, %s10
  %s13 = scalar_select 0, %s12, %s10
  $region1: #{tpu_custom_call.1} parent=0
    #allocation2 [shape = 'u8[512]{0}', space=smem, size = 0x200, scoped, tag = 'input window, operand 0, single buffered']
    #allocation3 [shape = 's32[2]{0}', space=sflag, size = 0x8, scoped, tag = 'scoped memory for tpu_custom_call.1']
    %14 = vsyncpa [#allocation3], 0
    loop: start=0, step=1, limit=4
    $region2: #{tpu_custom_call.1} parent=1 // loop_pre_header
      _
    $region3: #{tpu_custom_call.1} parent=1 // loop_header
      %s16 = sphi 0, %s20
      %p17 = scmp.ge.s32.totalorder %s16, 4
      %s24 = sphi 0, %s24
      %s26 = sphi 0, %s24
      %s27 = sphi 0, %s26
      %s41 = sphi 0, %s27
      %s47 = sphi 0, %s49
      %s50 = sphi 0, %s47
      %s51 = sphi 0, %s50
      %s67 = sphi 0, %s51
      %s73 = sphi 0, %s75
      %s76 = sphi 0, %s73
      %s77 = sphi 0, %s76
      %s93 = sphi 0, %s77
      %s97 = sphi 0, %s97
      %s99 = sphi 0, %s97
      %s100 = sphi 0, %s99
      %s114 = sphi 0, %s100
      %s118 = sphi 0, %s118
      %s120 = sphi 0, %s118
      %s121 = sphi 0, %s120
      %s135 = sphi 0, %s121
      %s139 = sphi 0, %s139
      %s141 = sphi 0, %s139
      %s142 = sphi 0, %s141
      %s156 = sphi 0, %s142
      %s160 = sphi 0, %s160
      %s162 = sphi 0, %s160
      %s163 = sphi 0, %s162
      %s177 = sphi 0, %s163
      %s181 = sphi 0, %s181
      %s183 = sphi 0, %s181
      %s184 = sphi 0, %s183
      %s198 = sphi 0, %s184
      %s202 = sphi 0, %s202
      %s204 = sphi 0, %s202
      %s205 = sphi 0, %s204
      %s219 = sphi 0, %s205
      %s225 = sphi 0, %s227
      %s228 = sphi 0, %s225
      %s229 = sphi 0, %s228
      %s245 = sphi 0, %s229
    $region4: #{tpu_custom_call.1} parent=1 // loop_header_branch
      %19 = sbr.rel (%p17) target = $region8
    $region5: #{tpu_custom_call.1} parent=1 // loop_body
      %s21 = ssub.s32 %s16, 1
      %s22 = ssub.s32 %s16, 2
      %s23 = sadd.s32 %s16, 1
      %s25 = sadd.s32 %s24, 1
      %p28 = scmp.eq.s32.totalorder %s16, 1
      %p29 = scmp.ne.s32.totalorder %s24, %s26
      %p30 = scmp.eq.s32.totalorder %s16, 0
      %p31 = por %p29, %p30
      %p32 = scmp.ne.s32.totalorder %s24, %s26
      %p33 = scmp.eq.s32.totalorder %s21, 1
      %p34 = por %p32, %p33
      %p35 = scmp.ne.s32.totalorder %s26, %s27
      %p36 = scmp.eq.s32.totalorder %s21, 0
      %p37 = por %p35, %p36
      %p38 = scmp.ne.s32.totalorder %s26, %s27
      %p39 = scmp.eq.s32.totalorder %s22, 1
      %p40 = por %p38, %p39
      %p42 = scmp.ne.s32.totalorder %s27, %s41
      %p43 = scmp.eq.s32.totalorder %s22, 0
      %p44 = por %p42, %p43
      %s45 = ssub.s32 %s16, %s23
      %p46 = scmp.eq.s32.totalorder %s45, 0
      %s48 = sadd.s32 %s47, 1
      %s49 = scalar_select %p46, %s47, %s48
      %p52 = pneg %p46
      %p53 = scmp.eq.s32.totalorder %s16, 1
      %p54 = por %p52, %p53
      %p55 = scmp.ne.s32.totalorder %s47, %s50
      %p56 = scmp.eq.s32.totalorder %s16, 0
      %p57 = por %p55, %p56
      %p58 = scmp.ne.s32.totalorder %s47, %s50
      %p59 = scmp.eq.s32.totalorder %s21, 1
      %p60 = por %p58, %p59
      %p61 = scmp.ne.s32.totalorder %s50, %s51
      %p62 = scmp.eq.s32.totalorder %s21, 0
      %p63 = por %p61, %p62
      %p64 = scmp.ne.s32.totalorder %s50, %s51
      %p65 = scmp.eq.s32.totalorder %s22, 1
      %p66 = por %p64, %p65
      %p68 = scmp.ne.s32.totalorder %s51, %s67
      %p69 = scmp.eq.s32.totalorder %s22, 0
      %p70 = por %p68, %p69
      %s71 = ssub.s32 %s16, %s23
      %p72 = scmp.eq.s32.totalorder %s71, 0
      %s74 = sadd.s32 %s73, 1
      %s75 = scalar_select %p72, %s73, %s74
      %p78 = pneg %p72
      %p79 = scmp.eq.s32.totalorder %s16, 1
      %p80 = por %p78, %p79
      %p81 = scmp.ne.s32.totalorder %s73, %s76
      %p82 = scmp.eq.s32.totalorder %s16, 0
      %p83 = por %p81, %p82
      %p84 = scmp.ne.s32.totalorder %s73, %s76
      %p85 = scmp.eq.s32.totalorder %s21, 1
      %p86 = por %p84, %p85
      %p87 = scmp.ne.s32.totalorder %s76, %s77
      %p88 = scmp.eq.s32.totalorder %s21, 0
      %p89 = por %p87, %p88
      %p90 = scmp.ne.s32.totalorder %s76, %s77
      %p91 = scmp.eq.s32.totalorder %s22, 1
      %p92 = por %p90, %p91
      %p94 = scmp.ne.s32.totalorder %s77, %s93
      %p95 = scmp.eq.s32.totalorder %s22, 0
      %p96 = por %p94, %p95
      %s98 = sadd.s32 %s97, 1
      %p101 = scmp.eq.s32.totalorder %s16, 1
      %p102 = scmp.ne.s32.totalorder %s97, %s99
      %p103 = scmp.eq.s32.totalorder %s16, 0
      %p104 = por %p102, %p103
      %p105 = scmp.ne.s32.totalorder %s97, %s99
      %p106 = scmp.eq.s32.totalorder %s21, 1
      %p107 = por %p105, %p106
      %p108 = scmp.ne.s32.totalorder %s99, %s100
      %p109 = scmp.eq.s32.totalorder %s21, 0
      %p110 = por %p108, %p109
      %p111 = scmp.ne.s32.totalorder %s99, %s100
      %p112 = scmp.eq.s32.totalorder %s22, 1
      %p113 = por %p111, %p112
      %p115 = scmp.ne.s32.totalorder %s100, %s114
      %p116 = scmp.eq.s32.totalorder %s22, 0
      %p117 = por %p115, %p116
      %s119 = sadd.s32 %s118, 1
      %p122 = scmp.eq.s32.totalorder %s16, 1
      %p123 = scmp.ne.s32.totalorder %s118, %s120
      %p124 = scmp.eq.s32.totalorder %s16, 0
      %p125 = por %p123, %p124
      %p126 = scmp.ne.s32.totalorder %s118, %s120
      %p127 = scmp.eq.s32.totalorder %s21, 1
      %p128 = por %p126, %p127
      %p129 = scmp.ne.s32.totalorder %s120, %s121
      %p130 = scmp.eq.s32.totalorder %s21, 0
      %p131 = por %p129, %p130
      %p132 = scmp.ne.s32.totalorder %s120, %s121
      %p133 = scmp.eq.s32.totalorder %s22, 1
      %p134 = por %p132, %p133
      %p136 = scmp.ne.s32.totalorder %s121, %s135
      %p137 = scmp.eq.s32.totalorder %s22, 0
      %p138 = por %p136, %p137
      %s140 = sadd.s32 %s139, 1
      %p143 = scmp.eq.s32.totalorder %s16, 1
      %p144 = scmp.ne.s32.totalorder %s139, %s141
      %p145 = scmp.eq.s32.totalorder %s16, 0
      %p146 = por %p144, %p145
      %p147 = scmp.ne.s32.totalorder %s139, %s141
      %p148 = scmp.eq.s32.totalorder %s21, 1
      %p149 = por %p147, %p148
      %p150 = scmp.ne.s32.totalorder %s141, %s142
      %p151 = scmp.eq.s32.totalorder %s21, 0
      %p152 = por %p150, %p151
      %p153 = scmp.ne.s32.totalorder %s141, %s142
      %p154 = scmp.eq.s32.totalorder %s22, 1
      %p155 = por %p153, %p154
      %p157 = scmp.ne.s32.totalorder %s142, %s156
      %p158 = scmp.eq.s32.totalorder %s22, 0
      %p159 = por %p157, %p158
      %s161 = sadd.s32 %s160, 1
      %p164 = scmp.eq.s32.totalorder %s16, 1
      %p165 = scmp.ne.s32.totalorder %s160, %s162
      %p166 = scmp.eq.s32.totalorder %s16, 0
      %p167 = por %p165, %p166
      %p168 = scmp.ne.s32.totalorder %s160, %s162
      %p169 = scmp.eq.s32.totalorder %s21, 1
      %p170 = por %p168, %p169
      %p171 = scmp.ne.s32.totalorder %s162, %s163
      %p172 = scmp.eq.s32.totalorder %s21, 0
      %p173 = por %p171, %p172
      %p174 = scmp.ne.s32.totalorder %s162, %s163
      %p175 = scmp.eq.s32.totalorder %s22, 1
      %p176 = por %p174, %p175
      %p178 = scmp.ne.s32.totalorder %s163, %s177
      %p179 = scmp.eq.s32.totalorder %s22, 0
      %p180 = por %p178, %p179
      %s182 = sadd.s32 %s181, 1
      %p185 = scmp.eq.s32.totalorder %s16, 1
      %p186 = scmp.ne.s32.totalorder %s181, %s183
      %p187 = scmp.eq.s32.totalorder %s16, 0
      %p188 = por %p186, %p187
      %p189 = scmp.ne.s32.totalorder %s181, %s183
      %p190 = scmp.eq.s32.totalorder %s21, 1
      %p191 = por %p189, %p190
      %p192 = scmp.ne.s32.totalorder %s183, %s184
      %p193 = scmp.eq.s32.totalorder %s21, 0
      %p194 = por %p192, %p193
      %p195 = scmp.ne.s32.totalorder %s183, %s184
      %p196 = scmp.eq.s32.totalorder %s22, 1
      %p197 = por %p195, %p196
      %p199 = scmp.ne.s32.totalorder %s184, %s198
      %p200 = scmp.eq.s32.totalorder %s22, 0
      %p201 = por %p199, %p200
      %s203 = sadd.s32 %s202, 1
      %p206 = scmp.eq.s32.totalorder %s16, 1
      %p207 = scmp.ne.s32.totalorder %s202, %s204
      %p208 = scmp.eq.s32.totalorder %s16, 0
      %p209 = por %p207, %p208
      %p210 = scmp.ne.s32.totalorder %s202, %s204
      %p211 = scmp.eq.s32.totalorder %s21, 1
      %p212 = por %p210, %p211
      %p213 = scmp.ne.s32.totalorder %s204, %s205
      %p214 = scmp.eq.s32.totalorder %s21, 0
      %p215 = por %p213, %p214
      %p216 = scmp.ne.s32.totalorder %s204, %s205
      %p217 = scmp.eq.s32.totalorder %s22, 1
      %p218 = por %p216, %p217
      %p220 = scmp.ne.s32.totalorder %s205, %s219
      %p221 = scmp.eq.s32.totalorder %s22, 0
      %p222 = por %p220, %p221
      %s223 = ssub.s32 %s16, %s23
      %p224 = scmp.eq.s32.totalorder %s223, 0
      %s226 = sadd.s32 %s225, 1
      %s227 = scalar_select %p224, %s225, %s226
      %p230 = pneg %p224
      %p231 = scmp.eq.s32.totalorder %s16, 1
      %p232 = por %p230, %p231
      %p233 = scmp.ne.s32.totalorder %s225, %s228
      %p234 = scmp.eq.s32.totalorder %s16, 0
      %p235 = por %p233, %p234
      %p236 = scmp.ne.s32.totalorder %s225, %s228
      %p237 = scmp.eq.s32.totalorder %s21, 1
      %p238 = por %p236, %p237
      %p239 = scmp.ne.s32.totalorder %s228, %s229
      %p240 = scmp.eq.s32.totalorder %s21, 0
      %p241 = por %p239, %p240
      %p242 = scmp.ne.s32.totalorder %s228, %s229
      %p243 = scmp.eq.s32.totalorder %s22, 1
      %p244 = por %p242, %p243
      %p246 = scmp.ne.s32.totalorder %s229, %s245
      %p247 = scmp.eq.s32.totalorder %s22, 0
      %p248 = por %p246, %p247
      %p249 = scmp.le.s32.totalorder 1, %s16
      %p250 = scmp.lt.s32.totalorder %s16, 3
      %p251 = pnand %p249, %p250
      %p252 = pneg %p251
      // Predicated region
      $region9: #{tpu_custom_call.1} parent=5 // pred_check
        _
      $region10: #{tpu_custom_call.1} parent=5 // pred_check_branch
        %254 = sbr.rel (%p251) target = $region12
      $region11: #{tpu_custom_call.1} parent=5 // pred_region
        %s255 = ssub.s32 %s16, 1
        // Predicated region
        $region13: #{tpu_custom_call.1} parent=11 // pred_check
          %p256 = pneg %p37
        $region14: #{tpu_custom_call.1} parent=11 // pred_check_branch
          %258 = sbr.rel (%p256) target = $region16
        $region15: #{tpu_custom_call.1} parent=11 // pred_region
          %s260 = ssub.s32 16, 16
          %261 = vsyncadd [#allocation3], %s260
          %s263 = sshll.u32 %s0, 4
          %s264 = int_to_ptr.vmem [resolvable:$true] %s263
          %266 = dma.vmem_to_smem %s264, 16, [#allocation2], [#allocation3]
        $region16: #{tpu_custom_call.1} parent=11 // pred_fallthru
          _
        // Predicated region
        $region17: #{tpu_custom_call.1} parent=11 // pred_check
          %p267 = pneg %p110
        $region18: #{tpu_custom_call.1} parent=11 // pred_check_branch
          %269 = sbr.rel (%p267) target = $region20
        $region19: #{tpu_custom_call.1} parent=11 // pred_region
          _
        $region20: #{tpu_custom_call.1} parent=11 // pred_fallthru
          _
        // Predicated region
        $region21: #{tpu_custom_call.1} parent=11 // pred_check
          %p270 = pneg %p131
        $region22: #{tpu_custom_call.1} parent=11 // pred_check_branch
          %272 = sbr.rel (%p270) target = $region24
        $region23: #{tpu_custom_call.1} parent=11 // pred_region
          _
        $region24: #{tpu_custom_call.1} parent=11 // pred_fallthru
          _
        // Predicated region
        $region25: #{tpu_custom_call.1} parent=11 // pred_check
          %p273 = pneg %p152
        $region26: #{tpu_custom_call.1} parent=11 // pred_check_branch
          %275 = sbr.rel (%p273) target = $region28
        $region27: #{tpu_custom_call.1} parent=11 // pred_region
          _
        $region28: #{tpu_custom_call.1} parent=11 // pred_fallthru
          _
        // Predicated region
        $region29: #{tpu_custom_call.1} parent=11 // pred_check
          %p276 = pneg %p173
        $region30: #{tpu_custom_call.1} parent=11 // pred_check_branch
          %278 = sbr.rel (%p276) target = $region32
        $region31: #{tpu_custom_call.1} parent=11 // pred_region
          _
        $region32: #{tpu_custom_call.1} parent=11 // pred_fallthru
          _
        // Predicated region
        $region33: #{tpu_custom_call.1} parent=11 // pred_check
          %p279 = pneg %p194
        $region34: #{tpu_custom_call.1} parent=11 // pred_check_branch
          %281 = sbr.rel (%p279) target = $region36
        $region35: #{tpu_custom_call.1} parent=11 // pred_region
          _
        $region36: #{tpu_custom_call.1} parent=11 // pred_fallthru
          _
        // Predicated region
        $region37: #{tpu_custom_call.1} parent=11 // pred_check
          %p282 = pneg %p215
        $region38: #{tpu_custom_call.1} parent=11 // pred_check_branch
          %284 = sbr.rel (%p282) target = $region40
        $region39: #{tpu_custom_call.1} parent=11 // pred_region
          _
        $region40: #{tpu_custom_call.1} parent=11 // pred_fallthru
          _
      $region12: #{tpu_custom_call.1} parent=5 // pred_fallthru
        _
      %p285 = scmp.lt.s32.totalorder %s16, 2
      // Predicated region
      $region41: #{tpu_custom_call.1} parent=5 // pred_check
        %p286 = pneg %p285
      $region42: #{tpu_custom_call.1} parent=5 // pred_check_branch
        %288 = sbr.rel (%p286) target = $region44
      $region43: #{tpu_custom_call.1} parent=5 // pred_region
        // Predicated region
        $region45: #{tpu_custom_call.1} parent=43 // pred_check
          %p289 = pneg %p57
        $region46: #{tpu_custom_call.1} parent=43 // pred_check_branch
          %291 = sbr.rel (%p289) target = $region48
        $region47: #{tpu_custom_call.1} parent=43 // pred_region
          %p292 = scmp.lt.s32.totalorder %s16, 1
          %s293 = scalar_select %p292, %s16, 1
          %s294 = smul.addr %s293, 8
          %s295 = smul.addr %s294, 8
          %s296 = scalar_lea.vmem %s1, %s295
        $region48: #{tpu_custom_call.1} parent=43 // pred_fallthru
          _
        // Predicated region
        $region49: #{tpu_custom_call.1} parent=43 // pred_check
          %p297 = pneg %p83
        $region50: #{tpu_custom_call.1} parent=43 // pred_check_branch
          %299 = sbr.rel (%p297) target = $region52
        $region51: #{tpu_custom_call.1} parent=43 // pred_region
          %p300 = scmp.lt.s32.totalorder %s16, 1
          %s301 = scalar_select %p300, %s16, 1
          %s302 = smul.addr %s301, 8
          %s303 = smul.addr %s302, 8
          %s304 = scalar_lea.vmem %s2, %s303
        $region52: #{tpu_custom_call.1} parent=43 // pred_fallthru
          _
      $region44: #{tpu_custom_call.1} parent=5 // pred_fallthru
        _
      %p305 = scmp.le.s32.totalorder 1, %s16
      %p306 = scmp.lt.s32.totalorder %s16, 3
      %p307 = pnand %p305, %p306
      %p308 = pneg %p307
      // Predicated region
      $region53: #{tpu_custom_call.1} parent=5 // pred_check
        _
      $region54: #{tpu_custom_call.1} parent=5 // pred_check_branch
        %310 = sbr.rel (%p307) target = $region56
      $region55: #{tpu_custom_call.1} parent=5 // pred_region
        %s311 = ssub.s32 %s16, 1
        // Predicated region
        $region57: #{tpu_custom_call.1} parent=55 // pred_check
          %p312 = pneg %p37
        $region58: #{tpu_custom_call.1} parent=55 // pred_check_branch
          %314 = sbr.rel (%p312) target = $region60
        $region59: #{tpu_custom_call.1} parent=55 // pred_region
          %315 = dma.done [#allocation3], 16
        $region60: #{tpu_custom_call.1} parent=55 // pred_fallthru
          _
        %316 = sfence
        %p317 = pneg %p37
        %p318 = pneg %p34
        %p319 = scmp.lt.s32.totalorder %s21, 1
        %s320 = scalar_select %p319, %s21, 1
        %s321 = smul.addr %s320, 8
        %s322 = smul.addr %s321, 8
        %s323 = scalar_lea.vmem %s1, %s322
        %p324 = pneg %p63
        %p325 = pneg %p60
        %p326 = scmp.lt.s32.totalorder %s21, 1
        %s327 = scalar_select %p326, %s21, 1
        %s328 = smul.addr %s327, 8
        %s329 = smul.addr %s328, 8
        %s330 = scalar_lea.vmem %s2, %s329
        %p331 = pneg %p89
        %p332 = pneg %p86
        %p333 = pneg %p110
        %p334 = pneg %p107
        %p335 = pneg %p131
        %p336 = pneg %p128
        %p337 = pneg %p152
        %p338 = pneg %p149
        %p339 = pneg %p173
        %p340 = pneg %p170
        %p341 = pneg %p194
        %p342 = pneg %p191
        %p343 = pneg %p215
        %p344 = pneg %p212
        %p345 = pneg %p241
        %p346 = pneg %p238
        %p347 = scmp.lt.s32.totalorder %s21, 1
        %s348 = scalar_select %p347, %s21, 1
        %s349 = smul.addr %s348, 8
        %s350 = scalar_lea.vmem %s9, %s349
        %p351 = scmp.lt.s32.totalorder %s21, 1
        %s352 = scalar_select %p351, %s21, 1
        %s353 = smul.addr %s352, 8
        %s354 = smul.addr %s353, 8
        %s355 = scalar_lea.vmem %s1, %s354
        %p356 = scmp.lt.s32.totalorder %s21, 1
        %s357 = scalar_select %p356, %s21, 1
        %s358 = smul.addr %s357, 8
        %s359 = smul.addr %s358, 8
        %s360 = scalar_lea.vmem %s2, %s359
        %p361 = scmp.lt.s32.totalorder %s21, 1
        %s362 = scalar_select %p361, %s21, 1
        %s363 = smul.addr %s362, 8
        %s364 = scalar_lea.vmem %s9, %s363
        %s365 = sld [smem:[#allocation2]]
        %s366 = sld [smem:[#allocation2 + $0x1]]
        %v367 = vld [vmem:[%s355] sm:$0xff]
        %v368 = vld [vmem:[%s355 + $0x8] sm:$0xff]
        %v369 = vld [vmem:[%s355 + $0x10] sm:$0xff]
        %v370 = vld [vmem:[%s355 + $0x18] sm:$0xff]
        %v371 = vld [vmem:[%s355 + $0x20] sm:$0xff]
        %v372 = vld [vmem:[%s355 + $0x28] sm:$0xff]
        %v373 = vld [vmem:[%s355 + $0x30] sm:$0xff]
        %v374 = vld [vmem:[%s355 + $0x38] sm:$0xff]
        %v375 = vld [vmem:[%s360] sm:$0xff]
        %v376 = vld [vmem:[%s360 + $0x8] sm:$0xff]
        %v377 = vld [vmem:[%s360 + $0x10] sm:$0xff]
        %v378 = vld [vmem:[%s360 + $0x18] sm:$0xff]
        %v379 = vld [vmem:[%s360 + $0x20] sm:$0xff]
        %v380 = vld [vmem:[%s360 + $0x28] sm:$0xff]
        %v381 = vld [vmem:[%s360 + $0x30] sm:$0xff]
        %v382 = vld [vmem:[%s360 + $0x38] sm:$0xff]
        %v383 = vld [vmem:[%s3] sm:$0xff]
        %v384 = vld [vmem:[%s3 + $0x8] sm:$0xff]
        %v385 = vld [vmem:[%s3 + $0x10] sm:$0xff]
        %v386 = vld [vmem:[%s3 + $0x18] sm:$0xff]
        %v387 = vld [vmem:[%s3 + $0x20] sm:$0xff]
        %v388 = vld [vmem:[%s3 + $0x28] sm:$0xff]
        %v389 = vld [vmem:[%s3 + $0x30] sm:$0xff]
        %v390 = vld [vmem:[%s3 + $0x38] sm:$0xff]
        %v391 = vld [vmem:[%s3 + $0x40] sm:$0xff]
        %v392 = vld [vmem:[%s3 + $0x48] sm:$0xff]
        %v393 = vld [vmem:[%s3 + $0x50] sm:$0xff]
        %v394 = vld [vmem:[%s3 + $0x58] sm:$0xff]
        %v395 = vld [vmem:[%s3 + $0x60] sm:$0xff]
        %v396 = vld [vmem:[%s3 + $0x68] sm:$0xff]
        %v397 = vld [vmem:[%s3 + $0x70] sm:$0xff]
        %v398 = vld [vmem:[%s3 + $0x78] sm:$0xff]
        %v399 = vld [vmem:[%s3 + $0x80] sm:$0xff]
        %v400 = vld [vmem:[%s3 + $0x88] sm:$0xff]
        %v401 = vld [vmem:[%s3 + $0x90] sm:$0xff]
        %v402 = vld [vmem:[%s3 + $0x98] sm:$0xff]
        %v403 = vld [vmem:[%s3 + $0xa0] sm:$0xff]
        %v404 = vld [vmem:[%s3 + $0xa8] sm:$0xff]
        %v405 = vld [vmem:[%s3 + $0xb0] sm:$0xff]
        %v406 = vld [vmem:[%s3 + $0xb8] sm:$0xff]
        %v407 = vld [vmem:[%s3 + $0xc0] sm:$0xff]
        %v408 = vld [vmem:[%s3 + $0xc8] sm:$0xff]
        %v409 = vld [vmem:[%s3 + $0xd0] sm:$0xff]
        %v410 = vld [vmem:[%s3 + $0xd8] sm:$0xff]
        %v411 = vld [vmem:[%s3 + $0xe0] sm:$0xff]
        %v412 = vld [vmem:[%s3 + $0xe8] sm:$0xff]
        %v413 = vld [vmem:[%s3 + $0xf0] sm:$0xff]
        %v414 = vld [vmem:[%s3 + $0xf8] sm:$0xff]
        %v415 = vld [vmem:[%s3 + $0x100] sm:$0xff]
        %v416 = vld [vmem:[%s3 + $0x108] sm:$0xff]
        %v417 = vld [vmem:[%s3 + $0x110] sm:$0xff]
        %v418 = vld [vmem:[%s3 + $0x118] sm:$0xff]
        %v419 = vld [vmem:[%s3 + $0x120] sm:$0xff]
        %v420 = vld [vmem:[%s3 + $0x128] sm:$0xff]
        %v421 = vld [vmem:[%s3 + $0x130] sm:$0xff]
        %v422 = vld [vmem:[%s3 + $0x138] sm:$0xff]
        %v423 = vld [vmem:[%s3 + $0x140] sm:$0xff]
        %v424 = vld [vmem:[%s3 + $0x148] sm:$0xff]
        %v425 = vld [vmem:[%s3 + $0x150] sm:$0xff]
        %v426 = vld [vmem:[%s3 + $0x158] sm:$0xff]
        %v427 = vld [vmem:[%s3 + $0x160] sm:$0xff]
        %v428 = vld [vmem:[%s3 + $0x168] sm:$0xff]
        %v429 = vld [vmem:[%s3 + $0x170] sm:$0xff]
        %v430 = vld [vmem:[%s3 + $0x178] sm:$0xff]
        %v431 = vld [vmem:[%s3 + $0x180] sm:$0xff]
        %v432 = vld [vmem:[%s3 + $0x188] sm:$0xff]
        %v433 = vld [vmem:[%s3 + $0x190] sm:$0xff]
        %v434 = vld [vmem:[%s3 + $0x198] sm:$0xff]
        %v435 = vld [vmem:[%s3 + $0x1a0] sm:$0xff]
        %v436 = vld [vmem:[%s3 + $0x1a8] sm:$0xff]
        %v437 = vld [vmem:[%s3 + $0x1b0] sm:$0xff]
        %v438 = vld [vmem:[%s3 + $0x1b8] sm:$0xff]
        %v439 = vld [vmem:[%s3 + $0x1c0] sm:$0xff]
        %v440 = vld [vmem:[%s3 + $0x1c8] sm:$0xff]
        %v441 = vld [vmem:[%s3 + $0x1d0] sm:$0xff]
        %v442 = vld [vmem:[%s3 + $0x1d8] sm:$0xff]
        %v443 = vld [vmem:[%s3 + $0x1e0] sm:$0xff]
        %v444 = vld [vmem:[%s3 + $0x1e8] sm:$0xff]
        %v445 = vld [vmem:[%s3 + $0x1f0] sm:$0xff]
        %v446 = vld [vmem:[%s3 + $0x1f8] sm:$0xff]
        %v447 = vld [vmem:[%s3 + $0x200] sm:$0xff]
        %v448 = vld [vmem:[%s3 + $0x208] sm:$0xff]
        %v449 = vld [vmem:[%s3 + $0x210] sm:$0xff]
        %v450 = vld [vmem:[%s3 + $0x218] sm:$0xff]
        %v451 = vld [vmem:[%s3 + $0x220] sm:$0xff]
        %v452 = vld [vmem:[%s3 + $0x228] sm:$0xff]
        %v453 = vld [vmem:[%s3 + $0x230] sm:$0xff]
        %v454 = vld [vmem:[%s3 + $0x238] sm:$0xff]
        %v455 = vld [vmem:[%s3 + $0x240] sm:$0xff]
        %v456 = vld [vmem:[%s3 + $0x248] sm:$0xff]
        %v457 = vld [vmem:[%s3 + $0x250] sm:$0xff]
        %v458 = vld [vmem:[%s3 + $0x258] sm:$0xff]
        %v459 = vld [vmem:[%s3 + $0x260] sm:$0xff]
        %v460 = vld [vmem:[%s3 + $0x268] sm:$0xff]
        %v461 = vld [vmem:[%s3 + $0x270] sm:$0xff]
        %v462 = vld [vmem:[%s3 + $0x278] sm:$0xff]
        %v463 = vld [vmem:[%s3 + $0x280] sm:$0xff]
        %v464 = vld [vmem:[%s3 + $0x288] sm:$0xff]
        %v465 = vld [vmem:[%s3 + $0x290] sm:$0xff]
        %v466 = vld [vmem:[%s3 + $0x298] sm:$0xff]
        %v467 = vld [vmem:[%s3 + $0x2a0] sm:$0xff]
        %v468 = vld [vmem:[%s3 + $0x2a8] sm:$0xff]
        %v469 = vld [vmem:[%s3 + $0x2b0] sm:$0xff]
        %v470 = vld [vmem:[%s3 + $0x2b8] sm:$0xff]
        %v471 = vld [vmem:[%s3 + $0x2c0] sm:$0xff]
        %v472 = vld [vmem:[%s3 + $0x2c8] sm:$0xff]
        %v473 = vld [vmem:[%s3 + $0x2d0] sm:$0xff]
        %v474 = vld [vmem:[%s3 + $0x2d8] sm:$0xff]
        %v475 = vld [vmem:[%s3 + $0x2e0] sm:$0xff]
        %v476 = vld [vmem:[%s3 + $0x2e8] sm:$0xff]
        %v477 = vld [vmem:[%s3 + $0x2f0] sm:$0xff]
        %v478 = vld [vmem:[%s3 + $0x2f8] sm:$0xff]
        %v479 = vld [vmem:[%s3 + $0x300] sm:$0xff]
        %v480 = vld [vmem:[%s3 + $0x308] sm:$0xff]
        %v481 = vld [vmem:[%s3 + $0x310] sm:$0xff]
        %v482 = vld [vmem:[%s3 + $0x318] sm:$0xff]
        %v483 = vld [vmem:[%s3 + $0x320] sm:$0xff]
        %v484 = vld [vmem:[%s3 + $0x328] sm:$0xff]
        %v485 = vld [vmem:[%s3 + $0x330] sm:$0xff]
        %v486 = vld [vmem:[%s3 + $0x338] sm:$0xff]
        %v487 = vld [vmem:[%s3 + $0x340] sm:$0xff]
        %v488 = vld [vmem:[%s3 + $0x348] sm:$0xff]
        %v489 = vld [vmem:[%s3 + $0x350] sm:$0xff]
        %v490 = vld [vmem:[%s3 + $0x358] sm:$0xff]
        %v491 = vld [vmem:[%s3 + $0x360] sm:$0xff]
        %v492 = vld [vmem:[%s3 + $0x368] sm:$0xff]
        %v493 = vld [vmem:[%s3 + $0x370] sm:$0xff]
        %v494 = vld [vmem:[%s3 + $0x378] sm:$0xff]
        %v495 = vld [vmem:[%s3 + $0x380] sm:$0xff]
        %v496 = vld [vmem:[%s3 + $0x388] sm:$0xff]
        %v497 = vld [vmem:[%s3 + $0x390] sm:$0xff]
        %v498 = vld [vmem:[%s3 + $0x398] sm:$0xff]
        %v499 = vld [vmem:[%s3 + $0x3a0] sm:$0xff]
        %v500 = vld [vmem:[%s3 + $0x3a8] sm:$0xff]
        %v501 = vld [vmem:[%s3 + $0x3b0] sm:$0xff]
        %v502 = vld [vmem:[%s3 + $0x3b8] sm:$0xff]
        %v503 = vld [vmem:[%s3 + $0x3c0] sm:$0xff]
        %v504 = vld [vmem:[%s3 + $0x3c8] sm:$0xff]
        %v505 = vld [vmem:[%s3 + $0x3d0] sm:$0xff]
        %v506 = vld [vmem:[%s3 + $0x3d8] sm:$0xff]
        %v507 = vld [vmem:[%s3 + $0x3e0] sm:$0xff]
        %v508 = vld [vmem:[%s3 + $0x3e8] sm:$0xff]
        %v509 = vld [vmem:[%s3 + $0x3f0] sm:$0xff]
        %v510 = vld [vmem:[%s3 + $0x3f8] sm:$0xff]
        %v511 = vld [vmem:[%s4] sm:$0x1]
        %v513 = vlaneseq
        %v514 = vshrl.u32 %v513, 7
        %v515 = vsub.s32 0, %v514
        %v516 = vrot.slane %v511, %v515
        %518 = vmatprep.subr.mxu0 0.0
        %519 = vmatpush1.msra.mxu0 %v383
        %520 = vmatprep.subr.mxu0 0.0
        %521 = vmatpush1.msra.mxu0 %v384
        %522 = vmatprep.subr.mxu0 0.0
        %523 = vmatpush1.msra.mxu0 %v385
        %524 = vmatprep.subr.mxu0 0.0
        %525 = vmatpush1.msra.mxu0 %v386
        %526 = vmatprep.subr.mxu0 0.0
        %527 = vmatpush1.msra.mxu0 %v387
        %528 = vmatprep.subr.mxu0 0.0
        %529 = vmatpush1.msra.mxu0 %v388
        %530 = vmatprep.subr.mxu0 0.0
        %531 = vmatpush1.msra.mxu0 %v389
        %532 = vmatprep.subr.mxu0 0.0
        %533 = vmatpush1.msra.mxu0 %v390
        %534 = vmatprep.subr.mxu0 0.0
        %535 = vmatpush1.msra.mxu0 %v391
        %536 = vmatprep.subr.mxu0 0.0
        %537 = vmatpush1.msra.mxu0 %v392
        %538 = vmatprep.subr.mxu0 0.0
        %539 = vmatpush1.msra.mxu0 %v393
        %540 = vmatprep.subr.mxu0 0.0
        %541 = vmatpush1.msra.mxu0 %v394
        %542 = vmatprep.subr.mxu0 0.0
        %543 = vmatpush1.msra.mxu0 %v395
        %544 = vmatprep.subr.mxu0 0.0
        %545 = vmatpush1.msra.mxu0 %v396
        %546 = vmatprep.subr.mxu0 0.0
        %547 = vmatpush1.msra.mxu0 %v397
        %548 = vmatprep.subr.mxu0 0.0
        %549 = vmatpush1.msra.mxu0 %v398
        %550 = vmatprep.subr.mxu0 0.0
        %551 = vmatpush1.msra.mxu0 %v399
        %552 = vmatprep.subr.mxu0 0.0
        %553 = vmatpush1.msra.mxu0 %v400
        %554 = vmatprep.subr.mxu0 0.0
        %555 = vmatpush1.msra.mxu0 %v401
        %556 = vmatprep.subr.mxu0 0.0
        %557 = vmatpush1.msra.mxu0 %v402
        %558 = vmatprep.subr.mxu0 0.0
        %559 = vmatpush1.msra.mxu0 %v403
        %560 = vmatprep.subr.mxu0 0.0
        %561 = vmatpush1.msra.mxu0 %v404
        %562 = vmatprep.subr.mxu0 0.0
        %563 = vmatpush1.msra.mxu0 %v405
        %564 = vmatprep.subr.mxu0 0.0
        %565 = vmatpush1.msra.mxu0 %v406
        %566 = vmatprep.subr.mxu0 0.0
        %567 = vmatpush1.msra.mxu0 %v407
        %568 = vmatprep.subr.mxu0 0.0
        %569 = vmatpush1.msra.mxu0 %v408
        %570 = vmatprep.subr.mxu0 0.0
        %571 = vmatpush1.msra.mxu0 %v409
        %572 = vmatprep.subr.mxu0 0.0
        %573 = vmatpush1.msra.mxu0 %v410
        %574 = vmatprep.subr.mxu0 0.0
        %575 = vmatpush1.msra.mxu0 %v411
        %576 = vmatprep.subr.mxu0 0.0
        %577 = vmatpush1.msra.mxu0 %v412
        %578 = vmatprep.subr.mxu0 0.0
        %579 = vmatpush1.msra.mxu0 %v413
        %580 = vmatprep.subr.mxu0 0.0
        %581 = vmatpush1.msra.mxu0 %v414
        %582 = vmatprep.mubr.f32.mxu0 %v368
        %583 = vmatmul.mubr.f32.gmra.mrb[0].mxu0 %v367
        %v584 = vpop.f32.mrb[0].mxu0
        %v585 = vadd.f32 %v516, %v584
        %v586 = vpop.f32.mrb[0].mxu0
        %587 = vdwg.mxu0
        %588 = vmatprep.subr.mxu0 0.0
        %589 = vmatpush1.msra.mxu0 %v415
        %590 = vmatprep.subr.mxu0 0.0
        %591 = vmatpush1.msra.mxu0 %v416
        %592 = vmatprep.subr.mxu0 0.0
        %593 = vmatpush1.msra.mxu0 %v417
        %594 = vmatprep.subr.mxu0 0.0
        %595 = vmatpush1.msra.mxu0 %v418
        %596 = vmatprep.subr.mxu0 0.0
        %597 = vmatpush1.msra.mxu0 %v419
        %598 = vmatprep.subr.mxu0 0.0
        %599 = vmatpush1.msra.mxu0 %v420
        %600 = vmatprep.subr.mxu0 0.0
        %601 = vmatpush1.msra.mxu0 %v421
        %602 = vmatprep.subr.mxu0 0.0
        %603 = vmatpush1.msra.mxu0 %v422
        %604 = vmatprep.subr.mxu0 0.0
        %605 = vmatpush1.msra.mxu0 %v423
        %606 = vmatprep.subr.mxu0 0.0
        %607 = vmatpush1.msra.mxu0 %v424
        %608 = vmatprep.subr.mxu0 0.0
        %609 = vmatpush1.msra.mxu0 %v425
        %610 = vmatprep.subr.mxu0 0.0
        %611 = vmatpush1.msra.mxu0 %v426
        %612 = vmatprep.subr.mxu0 0.0
        %613 = vmatpush1.msra.mxu0 %v427
        %614 = vmatprep.subr.mxu0 0.0
        %615 = vmatpush1.msra.mxu0 %v428
        %616 = vmatprep.subr.mxu0 0.0
        %617 = vmatpush1.msra.mxu0 %v429
        %618 = vmatprep.subr.mxu0 0.0
        %619 = vmatpush1.msra.mxu0 %v430
        %620 = vmatprep.subr.mxu0 0.0
        %621 = vmatpush1.msra.mxu0 %v431
        %622 = vmatprep.subr.mxu0 0.0
        %623 = vmatpush1.msra.mxu0 %v432
        %624 = vmatprep.subr.mxu0 0.0
        %625 = vmatpush1.msra.mxu0 %v433
        %626 = vmatprep.subr.mxu0 0.0
        %627 = vmatpush1.msra.mxu0 %v434
        %628 = vmatprep.subr.mxu0 0.0
        %629 = vmatpush1.msra.mxu0 %v435
        %630 = vmatprep.subr.mxu0 0.0
        %631 = vmatpush1.msra.mxu0 %v436
        %632 = vmatprep.subr.mxu0 0.0
        %633 = vmatpush1.msra.mxu0 %v437
        %634 = vmatprep.subr.mxu0 0.0
        %635 = vmatpush1.msra.mxu0 %v438
        %636 = vmatprep.subr.mxu0 0.0
        %637 = vmatpush1.msra.mxu0 %v439
        %638 = vmatprep.subr.mxu0 0.0
        %639 = vmatpush1.msra.mxu0 %v440
        %640 = vmatprep.subr.mxu0 0.0
        %641 = vmatpush1.msra.mxu0 %v441
        %642 = vmatprep.subr.mxu0 0.0
        %643 = vmatpush1.msra.mxu0 %v442
        %644 = vmatprep.subr.mxu0 0.0
        %645 = vmatpush1.msra.mxu0 %v443
        %646 = vmatprep.subr.mxu0 0.0
        %647 = vmatpush1.msra.mxu0 %v444
        %648 = vmatprep.subr.mxu0 0.0
        %649 = vmatpush1.msra.mxu0 %v445
        %650 = vmatprep.subr.mxu0 0.0
        %651 = vmatpush1.msra.mxu0 %v446
        %652 = vmatprep.mubr.f32.mxu0 %v370
        %653 = vmatmul.mubr.f32.gmra.mrb[0].mxu0 %v369
        %v654 = vpop.f32.mrb[0].mxu0
        %v655 = vadd.f32 %v585, %v654
        %v656 = vpop.f32.mrb[0].mxu0
        %657 = vdwg.mxu0
        %658 = vmatprep.subr.mxu0 0.0
        %659 = vmatpush1.msra.mxu0 %v447
        %660 = vmatprep.subr.mxu0 0.0
        %661 = vmatpush1.msra.mxu0 %v448
        %662 = vmatprep.subr.mxu0 0.0
        %663 = vmatpush1.msra.mxu0 %v449
        %664 = vmatprep.subr.mxu0 0.0
        %665 = vmatpush1.msra.mxu0 %v450
        %666 = vmatprep.subr.mxu0 0.0
        %667 = vmatpush1.msra.mxu0 %v451
        %668 = vmatprep.subr.mxu0 0.0
        %669 = vmatpush1.msra.mxu0 %v452
        %670 = vmatprep.subr.mxu0 0.0
        %671 = vmatpush1.msra.mxu0 %v453
        %672 = vmatprep.subr.mxu0 0.0
        %673 = vmatpush1.msra.mxu0 %v454
        %674 = vmatprep.subr.mxu0 0.0
        %675 = vmatpush1.msra.mxu0 %v455
        %676 = vmatprep.subr.mxu0 0.0
        %677 = vmatpush1.msra.mxu0 %v456
        %678 = vmatprep.subr.mxu0 0.0
        %679 = vmatpush1.msra.mxu0 %v457
        %680 = vmatprep.subr.mxu0 0.0
        %681 = vmatpush1.msra.mxu0 %v458
        %682 = vmatprep.subr.mxu0 0.0
        %683 = vmatpush1.msra.mxu0 %v459
        %684 = vmatprep.subr.mxu0 0.0
        %685 = vmatpush1.msra.mxu0 %v460
        %686 = vmatprep.subr.mxu0 0.0
        %687 = vmatpush1.msra.mxu0 %v461
        %688 = vmatprep.subr.mxu0 0.0
        %689 = vmatpush1.msra.mxu0 %v462
        %690 = vmatprep.subr.mxu0 0.0
        %691 = vmatpush1.msra.mxu0 %v463
        %692 = vmatprep.subr.mxu0 0.0
        %693 = vmatpush1.msra.mxu0 %v464
        %694 = vmatprep.subr.mxu0 0.0
        %695 = vmatpush1.msra.mxu0 %v465
        %696 = vmatprep.subr.mxu0 0.0
        %697 = vmatpush1.msra.mxu0 %v466
        %698 = vmatprep.subr.mxu0 0.0
        %699 = vmatpush1.msra.mxu0 %v467
        %700 = vmatprep.subr.mxu0 0.0
        %701 = vmatpush1.msra.mxu0 %v468
        %702 = vmatprep.subr.mxu0 0.0
        %703 = vmatpush1.msra.mxu0 %v469
        %704 = vmatprep.subr.mxu0 0.0
        %705 = vmatpush1.msra.mxu0 %v470
        %706 = vmatprep.subr.mxu0 0.0
        %707 = vmatpush1.msra.mxu0 %v471
        %708 = vmatprep.subr.mxu0 0.0
        %709 = vmatpush1.msra.mxu0 %v472
        %710 = vmatprep.subr.mxu0 0.0
        %711 = vmatpush1.msra.mxu0 %v473
        %712 = vmatprep.subr.mxu0 0.0
        %713 = vmatpush1.msra.mxu0 %v474
        %714 = vmatprep.subr.mxu0 0.0
        %715 = vmatpush1.msra.mxu0 %v475
        %716 = vmatprep.subr.mxu0 0.0
        %717 = vmatpush1.msra.mxu0 %v476
        %718 = vmatprep.subr.mxu0 0.0
        %719 = vmatpush1.msra.mxu0 %v477
        %720 = vmatprep.subr.mxu0 0.0
        %721 = vmatpush1.msra.mxu0 %v478
        %722 = vmatprep.mubr.f32.mxu0 %v372
        %723 = vmatmul.mubr.f32.gmra.mrb[0].mxu0 %v371
        %v724 = vpop.f32.mrb[0].mxu0
        %v725 = vadd.f32 %v655, %v724
        %v726 = vpop.f32.mrb[0].mxu0
        %727 = vdwg.mxu0
        %728 = vmatprep.subr.mxu0 0.0
        %729 = vmatpush1.msra.mxu0 %v479
        %730 = vmatprep.subr.mxu0 0.0
        %731 = vmatpush1.msra.mxu0 %v480
        %732 = vmatprep.subr.mxu0 0.0
        %733 = vmatpush1.msra.mxu0 %v481
        %734 = vmatprep.subr.mxu0 0.0
        %735 = vmatpush1.msra.mxu0 %v482
        %736 = vmatprep.subr.mxu0 0.0
        %737 = vmatpush1.msra.mxu0 %v483
        %738 = vmatprep.subr.mxu0 0.0
        %739 = vmatpush1.msra.mxu0 %v484
        %740 = vmatprep.subr.mxu0 0.0
        %741 = vmatpush1.msra.mxu0 %v485
        %742 = vmatprep.subr.mxu0 0.0
        %743 = vmatpush1.msra.mxu0 %v486
        %744 = vmatprep.subr.mxu0 0.0
        %745 = vmatpush1.msra.mxu0 %v487
        %746 = vmatprep.subr.mxu0 0.0
        %747 = vmatpush1.msra.mxu0 %v488
        %748 = vmatprep.subr.mxu0 0.0
        %749 = vmatpush1.msra.mxu0 %v489
        %750 = vmatprep.subr.mxu0 0.0
        %751 = vmatpush1.msra.mxu0 %v490
        %752 = vmatprep.subr.mxu0 0.0
        %753 = vmatpush1.msra.mxu0 %v491
        %754 = vmatprep.subr.mxu0 0.0
        %755 = vmatpush1.msra.mxu0 %v492
        %756 = vmatprep.subr.mxu0 0.0
        %757 = vmatpush1.msra.mxu0 %v493
        %758 = vmatprep.subr.mxu0 0.0
        %759 = vmatpush1.msra.mxu0 %v494
        %760 = vmatprep.subr.mxu0 0.0
        %761 = vmatpush1.msra.mxu0 %v495
        %762 = vmatprep.subr.mxu0 0.0
        %763 = vmatpush1.msra.mxu0 %v496
        %764 = vmatprep.subr.mxu0 0.0
        %765 = vmatpush1.msra.mxu0 %v497
        %766 = vmatprep.subr.mxu0 0.0
        %767 = vmatpush1.msra.mxu0 %v498
        %768 = vmatprep.subr.mxu0 0.0
        %769 = vmatpush1.msra.mxu0 %v499
        %770 = vmatprep.subr.mxu0 0.0
        %771 = vmatpush1.msra.mxu0 %v500
        %772 = vmatprep.subr.mxu0 0.0
        %773 = vmatpush1.msra.mxu0 %v501
        %774 = vmatprep.subr.mxu0 0.0
        %775 = vmatpush1.msra.mxu0 %v502
        %776 = vmatprep.subr.mxu0 0.0
        %777 = vmatpush1.msra.mxu0 %v503
        %778 = vmatprep.subr.mxu0 0.0
        %779 = vmatpush1.msra.mxu0 %v504
        %780 = vmatprep.subr.mxu0 0.0
        %781 = vmatpush1.msra.mxu0 %v505
        %782 = vmatprep.subr.mxu0 0.0
        %783 = vmatpush1.msra.mxu0 %v506
        %784 = vmatprep.subr.mxu0 0.0
        %785 = vmatpush1.msra.mxu0 %v507
        %786 = vmatprep.subr.mxu0 0.0
        %787 = vmatpush1.msra.mxu0 %v508
        %788 = vmatprep.subr.mxu0 0.0
        %789 = vmatpush1.msra.mxu0 %v509
        %790 = vmatprep.subr.mxu0 0.0
        %791 = vmatpush1.msra.mxu0 %v510
        %792 = vmatprep.mubr.f32.mxu0 %v374
        %793 = vmatmul.mubr.f32.gmra.mrb[0].mxu0 %v373
        %v794 = vpop.f32.mrb[0].mxu0
        %v795 = vadd.f32 %v725, %v794
        %v796 = vpop.f32.mrb[0].mxu0
        %797 = vdwg.mxu0
        %v798 = vmax.f32 %v795, 0.0
        %v799 = vld [vmem:[%s5] sm:$0x1]
        %v801 = vlaneseq
        %v802 = vshrl.u32 %v801, 7
        %v803 = vsub.s32 0, %v802
        %v804 = vrot.slane %v799, %v803
        %v806 = vmul.f32 %v798, %v804
        %vm807 = vcmask 261120
        %v808 = vsel %vm807, %v806, 0.0
        %809 = vadd.xlane.f32.xlu0 %v808
        %v810 = vpop.xlane.xlu0 %809
        %v811 = vld [vmem:[%s6] sm:$0xff]
        %v812 = vld [vmem:[%s6 + $0x8] sm:$0xff]
        %v813 = vld [vmem:[%s6 + $0x10] sm:$0xff]
        %v814 = vld [vmem:[%s6 + $0x18] sm:$0xff]
        %v815 = vld [vmem:[%s6 + $0x20] sm:$0xff]
        %v816 = vld [vmem:[%s6 + $0x28] sm:$0xff]
        %v817 = vld [vmem:[%s6 + $0x30] sm:$0xff]
        %v818 = vld [vmem:[%s6 + $0x38] sm:$0xff]
        %v819 = vld [vmem:[%s6 + $0x40] sm:$0xff]
        %v820 = vld [vmem:[%s6 + $0x48] sm:$0xff]
        %v821 = vld [vmem:[%s6 + $0x50] sm:$0xff]
        %v822 = vld [vmem:[%s6 + $0x58] sm:$0xff]
        %v823 = vld [vmem:[%s6 + $0x60] sm:$0xff]
        %v824 = vld [vmem:[%s6 + $0x68] sm:$0xff]
        %v825 = vld [vmem:[%s6 + $0x70] sm:$0xff]
        %v826 = vld [vmem:[%s6 + $0x78] sm:$0xff]
        %v827 = vld [vmem:[%s6 + $0x80] sm:$0xff]
        %v828 = vld [vmem:[%s6 + $0x88] sm:$0xff]
        %v829 = vld [vmem:[%s6 + $0x90] sm:$0xff]
        %v830 = vld [vmem:[%s6 + $0x98] sm:$0xff]
        %v831 = vld [vmem:[%s6 + $0xa0] sm:$0xff]
        %v832 = vld [vmem:[%s6 + $0xa8] sm:$0xff]
        %v833 = vld [vmem:[%s6 + $0xb0] sm:$0xff]
        %v834 = vld [vmem:[%s6 + $0xb8] sm:$0xff]
        %v835 = vld [vmem:[%s6 + $0xc0] sm:$0xff]
        %v836 = vld [vmem:[%s6 + $0xc8] sm:$0xff]
        %v837 = vld [vmem:[%s6 + $0xd0] sm:$0xff]
        %v838 = vld [vmem:[%s6 + $0xd8] sm:$0xff]
        %v839 = vld [vmem:[%s6 + $0xe0] sm:$0xff]
        %v840 = vld [vmem:[%s6 + $0xe8] sm:$0xff]
        %v841 = vld [vmem:[%s6 + $0xf0] sm:$0xff]
        %v842 = vld [vmem:[%s6 + $0xf8] sm:$0xff]
        %v843 = vld [vmem:[%s6 + $0x100] sm:$0xff]
        %v844 = vld [vmem:[%s6 + $0x108] sm:$0xff]
        %v845 = vld [vmem:[%s6 + $0x110] sm:$0xff]
        %v846 = vld [vmem:[%s6 + $0x118] sm:$0xff]
        %v847 = vld [vmem:[%s6 + $0x120] sm:$0xff]
        %v848 = vld [vmem:[%s6 + $0x128] sm:$0xff]
        %v849 = vld [vmem:[%s6 + $0x130] sm:$0xff]
        %v850 = vld [vmem:[%s6 + $0x138] sm:$0xff]
        %v851 = vld [vmem:[%s6 + $0x140] sm:$0xff]
        %v852 = vld [vmem:[%s6 + $0x148] sm:$0xff]
        %v853 = vld [vmem:[%s6 + $0x150] sm:$0xff]
        %v854 = vld [vmem:[%s6 + $0x158] sm:$0xff]
        %v855 = vld [vmem:[%s6 + $0x160] sm:$0xff]
        %v856 = vld [vmem:[%s6 + $0x168] sm:$0xff]
        %v857 = vld [vmem:[%s6 + $0x170] sm:$0xff]
        %v858 = vld [vmem:[%s6 + $0x178] sm:$0xff]
        %v859 = vld [vmem:[%s6 + $0x180] sm:$0xff]
        %v860 = vld [vmem:[%s6 + $0x188] sm:$0xff]
        %v861 = vld [vmem:[%s6 + $0x190] sm:$0xff]
        %v862 = vld [vmem:[%s6 + $0x198] sm:$0xff]
        %v863 = vld [vmem:[%s6 + $0x1a0] sm:$0xff]
        %v864 = vld [vmem:[%s6 + $0x1a8] sm:$0xff]
        %v865 = vld [vmem:[%s6 + $0x1b0] sm:$0xff]
        %v866 = vld [vmem:[%s6 + $0x1b8] sm:$0xff]
        %v867 = vld [vmem:[%s6 + $0x1c0] sm:$0xff]
        %v868 = vld [vmem:[%s6 + $0x1c8] sm:$0xff]
        %v869 = vld [vmem:[%s6 + $0x1d0] sm:$0xff]
        %v870 = vld [vmem:[%s6 + $0x1d8] sm:$0xff]
        %v871 = vld [vmem:[%s6 + $0x1e0] sm:$0xff]
        %v872 = vld [vmem:[%s6 + $0x1e8] sm:$0xff]
        %v873 = vld [vmem:[%s6 + $0x1f0] sm:$0xff]
        %v874 = vld [vmem:[%s6 + $0x1f8] sm:$0xff]
        %v875 = vld [vmem:[%s6 + $0x200] sm:$0xff]
        %v876 = vld [vmem:[%s6 + $0x208] sm:$0xff]
        %v877 = vld [vmem:[%s6 + $0x210] sm:$0xff]
        %v878 = vld [vmem:[%s6 + $0x218] sm:$0xff]
        %v879 = vld [vmem:[%s6 + $0x220] sm:$0xff]
        %v880 = vld [vmem:[%s6 + $0x228] sm:$0xff]
        %v881 = vld [vmem:[%s6 + $0x230] sm:$0xff]
        %v882 = vld [vmem:[%s6 + $0x238] sm:$0xff]
        %v883 = vld [vmem:[%s6 + $0x240] sm:$0xff]
        %v884 = vld [vmem:[%s6 + $0x248] sm:$0xff]
        %v885 = vld [vmem:[%s6 + $0x250] sm:$0xff]
        %v886 = vld [vmem:[%s6 + $0x258] sm:$0xff]
        %v887 = vld [vmem:[%s6 + $0x260] sm:$0xff]
        %v888 = vld [vmem:[%s6 + $0x268] sm:$0xff]
        %v889 = vld [vmem:[%s6 + $0x270] sm:$0xff]
        %v890 = vld [vmem:[%s6 + $0x278] sm:$0xff]
        %v891 = vld [vmem:[%s6 + $0x280] sm:$0xff]
        %v892 = vld [vmem:[%s6 + $0x288] sm:$0xff]
        %v893 = vld [vmem:[%s6 + $0x290] sm:$0xff]
        %v894 = vld [vmem:[%s6 + $0x298] sm:$0xff]
        %v895 = vld [vmem:[%s6 + $0x2a0] sm:$0xff]
        %v896 = vld [vmem:[%s6 + $0x2a8] sm:$0xff]
        %v897 = vld [vmem:[%s6 + $0x2b0] sm:$0xff]
        %v898 = vld [vmem:[%s6 + $0x2b8] sm:$0xff]
        %v899 = vld [vmem:[%s6 + $0x2c0] sm:$0xff]
        %v900 = vld [vmem:[%s6 + $0x2c8] sm:$0xff]
        %v901 = vld [vmem:[%s6 + $0x2d0] sm:$0xff]
        %v902 = vld [vmem:[%s6 + $0x2d8] sm:$0xff]
        %v903 = vld [vmem:[%s6 + $0x2e0] sm:$0xff]
        %v904 = vld [vmem:[%s6 + $0x2e8] sm:$0xff]
        %v905 = vld [vmem:[%s6 + $0x2f0] sm:$0xff]
        %v906 = vld [vmem:[%s6 + $0x2f8] sm:$0xff]
        %v907 = vld [vmem:[%s6 + $0x300] sm:$0xff]
        %v908 = vld [vmem:[%s6 + $0x308] sm:$0xff]
        %v909 = vld [vmem:[%s6 + $0x310] sm:$0xff]
        %v910 = vld [vmem:[%s6 + $0x318] sm:$0xff]
        %v911 = vld [vmem:[%s6 + $0x320] sm:$0xff]
        %v912 = vld [vmem:[%s6 + $0x328] sm:$0xff]
        %v913 = vld [vmem:[%s6 + $0x330] sm:$0xff]
        %v914 = vld [vmem:[%s6 + $0x338] sm:$0xff]
        %v915 = vld [vmem:[%s6 + $0x340] sm:$0xff]
        %v916 = vld [vmem:[%s6 + $0x348] sm:$0xff]
        %v917 = vld [vmem:[%s6 + $0x350] sm:$0xff]
        %v918 = vld [vmem:[%s6 + $0x358] sm:$0xff]
        %v919 = vld [vmem:[%s6 + $0x360] sm:$0xff]
        %v920 = vld [vmem:[%s6 + $0x368] sm:$0xff]
        %v921 = vld [vmem:[%s6 + $0x370] sm:$0xff]
        %v922 = vld [vmem:[%s6 + $0x378] sm:$0xff]
        %v923 = vld [vmem:[%s6 + $0x380] sm:$0xff]
        %v924 = vld [vmem:[%s6 + $0x388] sm:$0xff]
        %v925 = vld [vmem:[%s6 + $0x390] sm:$0xff]
        %v926 = vld [vmem:[%s6 + $0x398] sm:$0xff]
        %v927 = vld [vmem:[%s6 + $0x3a0] sm:$0xff]
        %v928 = vld [vmem:[%s6 + $0x3a8] sm:$0xff]
        %v929 = vld [vmem:[%s6 + $0x3b0] sm:$0xff]
        %v930 = vld [vmem:[%s6 + $0x3b8] sm:$0xff]
        %v931 = vld [vmem:[%s6 + $0x3c0] sm:$0xff]
        %v932 = vld [vmem:[%s6 + $0x3c8] sm:$0xff]
        %v933 = vld [vmem:[%s6 + $0x3d0] sm:$0xff]
        %v934 = vld [vmem:[%s6 + $0x3d8] sm:$0xff]
        %v935 = vld [vmem:[%s6 + $0x3e0] sm:$0xff]
        %v936 = vld [vmem:[%s6 + $0x3e8] sm:$0xff]
        %v937 = vld [vmem:[%s6 + $0x3f0] sm:$0xff]
        %v938 = vld [vmem:[%s6 + $0x3f8] sm:$0xff]
        %v939 = vld [vmem:[%s7] sm:$0x1]
        %v941 = vlaneseq
        %v942 = vshrl.u32 %v941, 7
        %v943 = vsub.s32 0, %v942
        %v944 = vrot.slane %v939, %v943
        %946 = vmatprep.subr.mxu0 0.0
        %947 = vmatpush1.msra.mxu0 %v811
        %948 = vmatprep.subr.mxu0 0.0
        %949 = vmatpush1.msra.mxu0 %v812
        %950 = vmatprep.subr.mxu0 0.0
        %951 = vmatpush1.msra.mxu0 %v813
        %952 = vmatprep.subr.mxu0 0.0
        %953 = vmatpush1.msra.mxu0 %v814
        %954 = vmatprep.subr.mxu0 0.0
        %955 = vmatpush1.msra.mxu0 %v815
        %956 = vmatprep.subr.mxu0 0.0
        %957 = vmatpush1.msra.mxu0 %v816
        %958 = vmatprep.subr.mxu0 0.0
        %959 = vmatpush1.msra.mxu0 %v817
        %960 = vmatprep.subr.mxu0 0.0
        %961 = vmatpush1.msra.mxu0 %v818
        %962 = vmatprep.subr.mxu0 0.0
        %963 = vmatpush1.msra.mxu0 %v819
        %964 = vmatprep.subr.mxu0 0.0
        %965 = vmatpush1.msra.mxu0 %v820
        %966 = vmatprep.subr.mxu0 0.0
        %967 = vmatpush1.msra.mxu0 %v821
        %968 = vmatprep.subr.mxu0 0.0
        %969 = vmatpush1.msra.mxu0 %v822
        %970 = vmatprep.subr.mxu0 0.0
        %971 = vmatpush1.msra.mxu0 %v823
        %972 = vmatprep.subr.mxu0 0.0
        %973 = vmatpush1.msra.mxu0 %v824
        %974 = vmatprep.subr.mxu0 0.0
        %975 = vmatpush1.msra.mxu0 %v825
        %976 = vmatprep.subr.mxu0 0.0
        %977 = vmatpush1.msra.mxu0 %v826
        %978 = vmatprep.subr.mxu0 0.0
        %979 = vmatpush1.msra.mxu0 %v827
        %980 = vmatprep.subr.mxu0 0.0
        %981 = vmatpush1.msra.mxu0 %v828
        %982 = vmatprep.subr.mxu0 0.0
        %983 = vmatpush1.msra.mxu0 %v829
        %984 = vmatprep.subr.mxu0 0.0
        %985 = vmatpush1.msra.mxu0 %v830
        %986 = vmatprep.subr.mxu0 0.0
        %987 = vmatpush1.msra.mxu0 %v831
        %988 = vmatprep.subr.mxu0 0.0
        %989 = vmatpush1.msra.mxu0 %v832
        %990 = vmatprep.subr.mxu0 0.0
        %991 = vmatpush1.msra.mxu0 %v833
        %992 = vmatprep.subr.mxu0 0.0
        %993 = vmatpush1.msra.mxu0 %v834
        %994 = vmatprep.subr.mxu0 0.0
        %995 = vmatpush1.msra.mxu0 %v835
        %996 = vmatprep.subr.mxu0 0.0
        %997 = vmatpush1.msra.mxu0 %v836
        %998 = vmatprep.subr.mxu0 0.0
        %999 = vmatpush1.msra.mxu0 %v837
        %1000 = vmatprep.subr.mxu0 0.0
        %1001 = vmatpush1.msra.mxu0 %v838
        %1002 = vmatprep.subr.mxu0 0.0
        %1003 = vmatpush1.msra.mxu0 %v839
        %1004 = vmatprep.subr.mxu0 0.0
        %1005 = vmatpush1.msra.mxu0 %v840
        %1006 = vmatprep.subr.mxu0 0.0
        %1007 = vmatpush1.msra.mxu0 %v841
        %1008 = vmatprep.subr.mxu0 0.0
        %1009 = vmatpush1.msra.mxu0 %v842
        %1010 = vmatprep.mubr.f32.mxu0 %v376
        %1011 = vmatmul.mubr.f32.gmra.mrb[0].mxu0 %v375
        %v1012 = vpop.f32.mrb[0].mxu0
        %v1013 = vadd.f32 %v944, %v1012
        %v1014 = vpop.f32.mrb[0].mxu0
        %1015 = vdwg.mxu0
        %1016 = vmatprep.subr.mxu0 0.0
        %1017 = vmatpush1.msra.mxu0 %v843
        %1018 = vmatprep.subr.mxu0 0.0
        %1019 = vmatpush1.msra.mxu0 %v844
        %1020 = vmatprep.subr.mxu0 0.0
        %1021 = vmatpush1.msra.mxu0 %v845
        %1022 = vmatprep.subr.mxu0 0.0
        %1023 = vmatpush1.msra.mxu0 %v846
        %1024 = vmatprep.subr.mxu0 0.0
        %1025 = vmatpush1.msra.mxu0 %v847
        %1026 = vmatprep.subr.mxu0 0.0
        %1027 = vmatpush1.msra.mxu0 %v848
        %1028 = vmatprep.subr.mxu0 0.0
        %1029 = vmatpush1.msra.mxu0 %v849
        %1030 = vmatprep.subr.mxu0 0.0
        %1031 = vmatpush1.msra.mxu0 %v850
        %1032 = vmatprep.subr.mxu0 0.0
        %1033 = vmatpush1.msra.mxu0 %v851
        %1034 = vmatprep.subr.mxu0 0.0
        %1035 = vmatpush1.msra.mxu0 %v852
        %1036 = vmatprep.subr.mxu0 0.0
        %1037 = vmatpush1.msra.mxu0 %v853
        %1038 = vmatprep.subr.mxu0 0.0
        %1039 = vmatpush1.msra.mxu0 %v854
        %1040 = vmatprep.subr.mxu0 0.0
        %1041 = vmatpush1.msra.mxu0 %v855
        %1042 = vmatprep.subr.mxu0 0.0
        %1043 = vmatpush1.msra.mxu0 %v856
        %1044 = vmatprep.subr.mxu0 0.0
        %1045 = vmatpush1.msra.mxu0 %v857
        %1046 = vmatprep.subr.mxu0 0.0
        %1047 = vmatpush1.msra.mxu0 %v858
        %1048 = vmatprep.subr.mxu0 0.0
        %1049 = vmatpush1.msra.mxu0 %v859
        %1050 = vmatprep.subr.mxu0 0.0
        %1051 = vmatpush1.msra.mxu0 %v860
        %1052 = vmatprep.subr.mxu0 0.0
        %1053 = vmatpush1.msra.mxu0 %v861
        %1054 = vmatprep.subr.mxu0 0.0
        %1055 = vmatpush1.msra.mxu0 %v862
        %1056 = vmatprep.subr.mxu0 0.0
        %1057 = vmatpush1.msra.mxu0 %v863
        %1058 = vmatprep.subr.mxu0 0.0
        %1059 = vmatpush1.msra.mxu0 %v864
        %1060 = vmatprep.subr.mxu0 0.0
        %1061 = vmatpush1.msra.mxu0 %v865
        %1062 = vmatprep.subr.mxu0 0.0
        %1063 = vmatpush1.msra.mxu0 %v866
        %1064 = vmatprep.subr.mxu0 0.0
        %1065 = vmatpush1.msra.mxu0 %v867
        %1066 = vmatprep.subr.mxu0 0.0
        %1067 = vmatpush1.msra.mxu0 %v868
        %1068 = vmatprep.subr.mxu0 0.0
        %1069 = vmatpush1.msra.mxu0 %v869
        %1070 = vmatprep.subr.mxu0 0.0
        %1071 = vmatpush1.msra.mxu0 %v870
        %1072 = vmatprep.subr.mxu0 0.0
        %1073 = vmatpush1.msra.mxu0 %v871
        %1074 = vmatprep.subr.mxu0 0.0
        %1075 = vmatpush1.msra.mxu0 %v872
        %1076 = vmatprep.subr.mxu0 0.0
        %1077 = vmatpush1.msra.mxu0 %v873
        %1078 = vmatprep.subr.mxu0 0.0
        %1079 = vmatpush1.msra.mxu0 %v874
        %1080 = vmatprep.mubr.f32.mxu0 %v378
        %1081 = vmatmul.mubr.f32.gmra.mrb[0].mxu0 %v377
        %v1082 = vpop.f32.mrb[0].mxu0
        %v1083 = vadd.f32 %v1013, %v1082
        %v1084 = vpop.f32.mrb[0].mxu0
        %1085 = vdwg.mxu0
        %1086 = vmatprep.subr.mxu0 0.0
        %1087 = vmatpush1.msra.mxu0 %v875
        %1088 = vmatprep.subr.mxu0 0.0
        %1089 = vmatpush1.msra.mxu0 %v876
        %1090 = vmatprep.subr.mxu0 0.0
        %1091 = vmatpush1.msra.mxu0 %v877
        %1092 = vmatprep.subr.mxu0 0.0
        %1093 = vmatpush1.msra.mxu0 %v878
        %1094 = vmatprep.subr.mxu0 0.0
        %1095 = vmatpush1.msra.mxu0 %v879
        %1096 = vmatprep.subr.mxu0 0.0
        %1097 = vmatpush1.msra.mxu0 %v880
        %1098 = vmatprep.subr.mxu0 0.0
        %1099 = vmatpush1.msra.mxu0 %v881
        %1100 = vmatprep.subr.mxu0 0.0
        %1101 = vmatpush1.msra.mxu0 %v882
        %1102 = vmatprep.subr.mxu0 0.0
        %1103 = vmatpush1.msra.mxu0 %v883
        %1104 = vmatprep.subr.mxu0 0.0
        %1105 = vmatpush1.msra.mxu0 %v884
        %1106 = vmatprep.subr.mxu0 0.0
        %1107 = vmatpush1.msra.mxu0 %v885
        %1108 = vmatprep.subr.mxu0 0.0
        %1109 = vmatpush1.msra.mxu0 %v886
        %1110 = vmatprep.subr.mxu0 0.0
        %1111 = vmatpush1.msra.mxu0 %v887
        %1112 = vmatprep.subr.mxu0 0.0
        %1113 = vmatpush1.msra.mxu0 %v888
        %1114 = vmatprep.subr.mxu0 0.0
        %1115 = vmatpush1.msra.mxu0 %v889
        %1116 = vmatprep.subr.mxu0 0.0
        %1117 = vmatpush1.msra.mxu0 %v890
        %1118 = vmatprep.subr.mxu0 0.0
        %1119 = vmatpush1.msra.mxu0 %v891
        %1120 = vmatprep.subr.mxu0 0.0
        %1121 = vmatpush1.msra.mxu0 %v892
        %1122 = vmatprep.subr.mxu0 0.0
        %1123 = vmatpush1.msra.mxu0 %v893
        %1124 = vmatprep.subr.mxu0 0.0
        %1125 = vmatpush1.msra.mxu0 %v894
        %1126 = vmatprep.subr.mxu0 0.0
        %1127 = vmatpush1.msra.mxu0 %v895
        %1128 = vmatprep.subr.mxu0 0.0
        %1129 = vmatpush1.msra.mxu0 %v896
        %1130 = vmatprep.subr.mxu0 0.0
        %1131 = vmatpush1.msra.mxu0 %v897
        %1132 = vmatprep.subr.mxu0 0.0
        %1133 = vmatpush1.msra.mxu0 %v898
        %1134 = vmatprep.subr.mxu0 0.0
        %1135 = vmatpush1.msra.mxu0 %v899
        %1136 = vmatprep.subr.mxu0 0.0
        %1137 = vmatpush1.msra.mxu0 %v900
        %1138 = vmatprep.subr.mxu0 0.0
        %1139 = vmatpush1.msra.mxu0 %v901
        %1140 = vmatprep.subr.mxu0 0.0
        %1141 = vmatpush1.msra.mxu0 %v902
        %1142 = vmatprep.subr.mxu0 0.0
        %1143 = vmatpush1.msra.mxu0 %v903
        %1144 = vmatprep.subr.mxu0 0.0
        %1145 = vmatpush1.msra.mxu0 %v904
        %1146 = vmatprep.subr.mxu0 0.0
        %1147 = vmatpush1.msra.mxu0 %v905
        %1148 = vmatprep.subr.mxu0 0.0
        %1149 = vmatpush1.msra.mxu0 %v906
        %1150 = vmatprep.mubr.f32.mxu0 %v380
        %1151 = vmatmul.mubr.f32.gmra.mrb[0].mxu0 %v379
        %v1152 = vpop.f32.mrb[0].mxu0
        %v1153 = vadd.f32 %v1083, %v1152
        %v1154 = vpop.f32.mrb[0].mxu0
        %1155 = vdwg.mxu0
        %1156 = vmatprep.subr.mxu0 0.0
        %1157 = vmatpush1.msra.mxu0 %v907
        %1158 = vmatprep.subr.mxu0 0.0
        %1159 = vmatpush1.msra.mxu0 %v908
        %1160 = vmatprep.subr.mxu0 0.0
        %1161 = vmatpush1.msra.mxu0 %v909
        %1162 = vmatprep.subr.mxu0 0.0
        %1163 = vmatpush1.msra.mxu0 %v910
        %1164 = vmatprep.subr.mxu0 0.0
        %1165 = vmatpush1.msra.mxu0 %v911
        %1166 = vmatprep.subr.mxu0 0.0
        %1167 = vmatpush1.msra.mxu0 %v912
        %1168 = vmatprep.subr.mxu0 0.0
        %1169 = vmatpush1.msra.mxu0 %v913
        %1170 = vmatprep.subr.mxu0 0.0
        %1171 = vmatpush1.msra.mxu0 %v914
        %1172 = vmatprep.subr.mxu0 0.0
        %1173 = vmatpush1.msra.mxu0 %v915
        %1174 = vmatprep.subr.mxu0 0.0
        %1175 = vmatpush1.msra.mxu0 %v916
        %1176 = vmatprep.subr.mxu0 0.0
        %1177 = vmatpush1.msra.mxu0 %v917
        %1178 = vmatprep.subr.mxu0 0.0
        %1179 = vmatpush1.msra.mxu0 %v918
        %1180 = vmatprep.subr.mxu0 0.0
        %1181 = vmatpush1.msra.mxu0 %v919
        %1182 = vmatprep.subr.mxu0 0.0
        %1183 = vmatpush1.msra.mxu0 %v920
        %1184 = vmatprep.subr.mxu0 0.0
        %1185 = vmatpush1.msra.mxu0 %v921
        %1186 = vmatprep.subr.mxu0 0.0
        %1187 = vmatpush1.msra.mxu0 %v922
        %1188 = vmatprep.subr.mxu0 0.0
        %1189 = vmatpush1.msra.mxu0 %v923
        %1190 = vmatprep.subr.mxu0 0.0
        %1191 = vmatpush1.msra.mxu0 %v924
        %1192 = vmatprep.subr.mxu0 0.0
        %1193 = vmatpush1.msra.mxu0 %v925
        %1194 = vmatprep.subr.mxu0 0.0
        %1195 = vmatpush1.msra.mxu0 %v926
        %1196 = vmatprep.subr.mxu0 0.0
        %1197 = vmatpush1.msra.mxu0 %v927
        %1198 = vmatprep.subr.mxu0 0.0
        %1199 = vmatpush1.msra.mxu0 %v928
        %1200 = vmatprep.subr.mxu0 0.0
        %1201 = vmatpush1.msra.mxu0 %v929
        %1202 = vmatprep.subr.mxu0 0.0
        %1203 = vmatpush1.msra.mxu0 %v930
        %1204 = vmatprep.subr.mxu0 0.0
        %1205 = vmatpush1.msra.mxu0 %v931
        %1206 = vmatprep.subr.mxu0 0.0
        %1207 = vmatpush1.msra.mxu0 %v932
        %1208 = vmatprep.subr.mxu0 0.0
        %1209 = vmatpush1.msra.mxu0 %v933
        %1210 = vmatprep.subr.mxu0 0.0
        %1211 = vmatpush1.msra.mxu0 %v934
        %1212 = vmatprep.subr.mxu0 0.0
        %1213 = vmatpush1.msra.mxu0 %v935
        %1214 = vmatprep.subr.mxu0 0.0
        %1215 = vmatpush1.msra.mxu0 %v936
        %1216 = vmatprep.subr.mxu0 0.0
        %1217 = vmatpush1.msra.mxu0 %v937
        %1218 = vmatprep.subr.mxu0 0.0
        %1219 = vmatpush1.msra.mxu0 %v938
        %1220 = vmatprep.mubr.f32.mxu0 %v382
        %1221 = vmatmul.mubr.f32.gmra.mrb[0].mxu0 %v381
        %v1222 = vpop.f32.mrb[0].mxu0
        %v1223 = vadd.f32 %v1153, %v1222
        %v1224 = vpop.f32.mrb[0].mxu0
        %1225 = vdwg.mxu0
        %v1226 = vmax.f32 %v1223, 0.0
        %v1227 = vld [vmem:[%s8] sm:$0x1]
        %v1229 = vlaneseq
        %v1230 = vshrl.u32 %v1229, 7
        %v1231 = vsub.s32 0, %v1230
        %v1232 = vrot.slane %v1227, %v1231
        %v1234 = vmul.f32 %v1226, %v1232
        %v1235 = vsel %vm807, %v1234, 0.0
        %1236 = vadd.xlane.f32.xlu0 %v1235
        %v1237 = vpop.xlane.xlu0 %1236
        %v1238 = vsub.f32 %v367, %v375
        %v1239 = vsub.f32 %v368, %v376
        %v1240 = vsub.f32 %v369, %v377
        %v1241 = vsub.f32 %v370, %v378
        %v1242 = vsub.f32 %v371, %v379
        %v1243 = vsub.f32 %v372, %v380
        %v1244 = vsub.f32 %v373, %v381
        %v1245 = vsub.f32 %v374, %v382
        %v1246 = vmul.f32 %v1238, %v1238
        %v1247 = vmul.f32 %v1239, %v1239
        %v1248 = vmul.f32 %v1240, %v1240
        %v1249 = vmul.f32 %v1241, %v1241
        %v1250 = vmul.f32 %v1242, %v1242
        %v1251 = vmul.f32 %v1243, %v1243
        %v1252 = vmul.f32 %v1244, %v1244
        %v1253 = vmul.f32 %v1245, %v1245
        %v1254 = vadd.f32 %v1246, %v1247
        %v1255 = vadd.f32 %v1254, %v1248
        %v1256 = vadd.f32 %v1255, %v1249
        %v1257 = vadd.f32 %v1256, %v1250
        %v1258 = vadd.f32 %v1257, %v1251
        %v1259 = vadd.f32 %v1258, %v1252
        %v1260 = vadd.f32 %v1259, %v1253
        %1261 = vadd.xlane.f32.xlu0 %v1260
        %v1262 = vpop.xlane.xlu0 %1261
        %v1263 = vadd.f32 %v810, %v1237
        %v1264 = vsub.f32 %v1263, %v1262
        %v1265 = vstv %s365
        %v1266 = vmul.f32 %v1265, %v1264
        %v1267 = vstv %s366
        %v1268 = vadd.f32 %v1266, %v1267
        %v1269 = vmul.f32 %v1268, 1.442695
        %v1270 = vpow.pop %v1269
        %vm1271 = vcmask 7168
        %1272 = vst.msk [vmem:[%s364] sm:$0xff] %vm1271, %v1270
        %p1273 = scmp.lt.s32.totalorder %s21, 1
        %s1274 = scalar_select %p1273, %s21, 1
        %s1275 = smul.addr %s1274, 8
        %s1276 = scalar_lea.vmem %s9, %s1275
        // Predicated region
        $region61: #{tpu_custom_call.1} parent=55 // pred_check
          %p1277 = pneg %p238
        $region62: #{tpu_custom_call.1} parent=55 // pred_check_branch
          %1279 = sbr.rel (%p1277) target = $region64
        $region63: #{tpu_custom_call.1} parent=55 // pred_region
          _
        $region64: #{tpu_custom_call.1} parent=55 // pred_fallthru
          _
      $region56: #{tpu_custom_call.1} parent=5 // pred_fallthru
        _
      %p1280 = scmp.le.s32.totalorder 2, %s16
      // Predicated region
      $region65: #{tpu_custom_call.1} parent=5 // pred_check
        %p1281 = pneg %p1280
      $region66: #{tpu_custom_call.1} parent=5 // pred_check_branch
        %1283 = sbr.rel (%p1281) target = $region68
      $region67: #{tpu_custom_call.1} parent=5 // pred_region
        %s1284 = ssub.s32 %s16, 2
        // Predicated region
        $region69: #{tpu_custom_call.1} parent=67 // pred_check
          %p1285 = pneg %p244
        $region70: #{tpu_custom_call.1} parent=67 // pred_check_branch
          %1287 = sbr.rel (%p1285) target = $region72
        $region71: #{tpu_custom_call.1} parent=67 // pred_region
          %p1288 = scmp.lt.s32.totalorder %s22, 1
          %s1289 = scalar_select %p1288, %s22, 1
          %s1290 = smul.addr %s1289, 8
          %s1291 = scalar_lea.vmem %s9, %s1290
        $region72: #{tpu_custom_call.1} parent=67 // pred_fallthru
          _
      $region68: #{tpu_custom_call.1} parent=5 // pred_fallthru
        _
    $region6: #{tpu_custom_call.1} parent=1 // loop_footer
      %s20 = sadd.s32 1, %s16
    $region7: #{tpu_custom_call.1} parent=1 // loop_footer_branch
      %15 = sbr.rel target = $region3
    $region8: #{tpu_custom_call.1} parent=1 // loop_exit
      _
    %1292 = vsyncpa [#allocation3], 1
    %s1293 = scalar_lea.sflag [#allocation3], 1
    %1294 = vsyncpa %s1293, 1

// kernel: tpu_custom_call.1
$region0: #{tpu_custom_call.1}
  #allocation0 [shape = 'u32[]', space=smem, size = 0x4, offset = 0x4, fixed_abs, tag = 'smem constant byte address 0x4 - core index']
  #allocation1 [shape = 'u32[144,128]{1,0:T(1,128)}', space=vmem, size = 0x12000, scoped, tag = 'internal scratch']
  %s0 = inlined_call_operand.vmem [shape: f32[2], index: 0, kind: input, shape index: {}]
  %s1 = inlined_call_operand.vmem [shape: f32[16,1024], index: 1, kind: input, shape index: {}]
  %s2 = inlined_call_operand.vmem [shape: f32[16,1024], index: 2, kind: input, shape index: {}]
  %s3 = inlined_call_operand.vmem [shape: f32[1024,32], index: 3, kind: input, shape index: {}]
  %s4 = inlined_call_operand.vmem [shape: f32[1,32], index: 4, kind: input, shape index: {}]
  %s5 = inlined_call_operand.vmem [shape: f32[1,32], index: 5, kind: input, shape index: {}]
  %s6 = inlined_call_operand.vmem [shape: f32[1024,32], index: 6, kind: input, shape index: {}]
  %s7 = inlined_call_operand.vmem [shape: f32[1,32], index: 7, kind: input, shape index: {}]
  %s8 = inlined_call_operand.vmem [shape: f32[1,32], index: 8, kind: input, shape index: {}]
  %s9 = inlined_call_operand.vmem [shape: f32[16,1], index: 9, kind: output, shape index: {}]
  %s10 = sld [smem:[#allocation0]]
  $region73: #{tpu_custom_call.1} parent=0
    _
  %s12 = ssub.s32 1, %s10
  %s13 = scalar_select 0, %s12, %s10
  $region1: #{tpu_custom_call.1} parent=0
    #allocation2 [shape = 'u8[512]{0}', space=smem, size = 0x200, scoped, tag = 'input window, operand 0, single buffered']
    #allocation3 [shape = 's32[2]{0}', space=sflag, size = 0x8, scoped, tag = 'scoped memory for tpu_custom_call.1']
    %14 = vsyncpa [#allocation3], 0
    loop: start=0, step=1, limit=4
    $region2: #{tpu_custom_call.1} parent=1 // loop_pre_header
      _
    $region3: #{tpu_custom_call.1} parent=1 // loop_header
      %s16 = sphi 0, %s20
      %p17 = scmp.ge.s32.totalorder %s16, 4
      %s24 = sphi 0, %s24
      %s26 = sphi 0, %s24
      %s27 = sphi 0, %s26
      %s41 = sphi 0, %s27
      %s47 = sphi 0, %s49
      %s50 = sphi 0, %s47
      %s51 = sphi 0, %s50
      %s67 = sphi 0, %s51
      %s73 = sphi 0, %s75
      %s76 = sphi 0, %s73
      %s77 = sphi 0, %s76
      %s93 = sphi 0, %s77
      %s97 = sphi 0, %s97
      %s99 = sphi 0, %s97
      %s100 = sphi 0, %s99
      %s114 = sphi 0, %s100
      %s118 = sphi 0, %s118
      %s120 = sphi 0, %s118
      %s121 = sphi 0, %s120
      %s135 = sphi 0, %s121
      %s139 = sphi 0, %s139
      %s141 = sphi 0, %s139
      %s142 = sphi 0, %s141
      %s156 = sphi 0, %s142
      %s160 = sphi 0, %s160
      %s162 = sphi 0, %s160
      %s163 = sphi 0, %s162
      %s177 = sphi 0, %s163
      %s181 = sphi 0, %s181
      %s183 = sphi 0, %s181
      %s184 = sphi 0, %s183
      %s198 = sphi 0, %s184
      %s202 = sphi 0, %s202
      %s204 = sphi 0, %s202
      %s205 = sphi 0, %s204
      %s219 = sphi 0, %s205
      %s225 = sphi 0, %s227
      %s228 = sphi 0, %s225
      %s229 = sphi 0, %s228
      %s245 = sphi 0, %s229
    $region4: #{tpu_custom_call.1} parent=1 // loop_header_branch
      %19 = sbr.rel (%p17) target = $region8
    $region5: #{tpu_custom_call.1} parent=1 // loop_body
      %s21 = ssub.s32 %s16, 1
      %s22 = ssub.s32 %s16, 2
      %s23 = sadd.s32 %s16, 1
      %s25 = sadd.s32 %s24, 1
      %p28 = scmp.eq.s32.totalorder %s16, 1
      %p29 = scmp.ne.s32.totalorder %s24, %s26
      %p30 = scmp.eq.s32.totalorder %s16, 0
      %p31 = por %p29, %p30
      %p32 = scmp.ne.s32.totalorder %s24, %s26
      %p33 = scmp.eq.s32.totalorder %s21, 1
      %p34 = por %p32, %p33
      %p35 = scmp.ne.s32.totalorder %s26, %s27
      %p36 = scmp.eq.s32.totalorder %s21, 0
      %p37 = por %p35, %p36
      %p38 = scmp.ne.s32.totalorder %s26, %s27
      %p39 = scmp.eq.s32.totalorder %s22, 1
      %p40 = por %p38, %p39
      %p42 = scmp.ne.s32.totalorder %s27, %s41
      %p43 = scmp.eq.s32.totalorder %s22, 0
      %p44 = por %p42, %p43
      %s45 = ssub.s32 %s16, %s23
      %p46 = scmp.eq.s32.totalorder %s45, 0
      %s48 = sadd.s32 %s47, 1
      %s49 = scalar_select %p46, %s47, %s48
      %p52 = pneg %p46
      %p53 = scmp.eq.s32.totalorder %s16, 1
      %p54 = por %p52, %p53
      %p55 = scmp.ne.s32.totalorder %s47, %s50
      %p56 = scmp.eq.s32.totalorder %s16, 0
      %p57 = por %p55, %p56
      %p58 = scmp.ne.s32.totalorder %s47, %s50
      %p59 = scmp.eq.s32.totalorder %s21, 1
      %p60 = por %p58, %p59
      %p61 = scmp.ne.s32.totalorder %s50, %s51
      %p62 = scmp.eq.s32.totalorder %s21, 0
      %p63 = por %p61, %p62
      %p64 = scmp.ne.s32.totalorder %s50, %s51
      %p65 = scmp.eq.s32.totalorder %s22, 1
      %p66 = por %p64, %p65
      %p68 = scmp.ne.s32.totalorder %s51, %s67
      %p69 = scmp.eq.s32.totalorder %s22, 0
      %p70 = por %p68, %p69
      %s71 = ssub.s32 %s16, %s23
      %p72 = scmp.eq.s32.totalorder %s71, 0
      %s74 = sadd.s32 %s73, 1
      %s75 = scalar_select %p72, %s73, %s74
      %p78 = pneg %p72
      %p79 = scmp.eq.s32.totalorder %s16, 1
      %p80 = por %p78, %p79
      %p81 = scmp.ne.s32.totalorder %s73, %s76
      %p82 = scmp.eq.s32.totalorder %s16, 0
      %p83 = por %p81, %p82
      %p84 = scmp.ne.s32.totalorder %s73, %s76
      %p85 = scmp.eq.s32.totalorder %s21, 1
      %p86 = por %p84, %p85
      %p87 = scmp.ne.s32.totalorder %s76, %s77
      %p88 = scmp.eq.s32.totalorder %s21, 0
      %p89 = por %p87, %p88
      %p90 = scmp.ne.s32.totalorder %s76, %s77
      %p91 = scmp.eq.s32.totalorder %s22, 1
      %p92 = por %p90, %p91
      %p94 = scmp.ne.s32.totalorder %s77, %s93
      %p95 = scmp.eq.s32.totalorder %s22, 0
      %p96 = por %p94, %p95
      %s98 = sadd.s32 %s97, 1
      %p101 = scmp.eq.s32.totalorder %s16, 1
      %p102 = scmp.ne.s32.totalorder %s97, %s99
      %p103 = scmp.eq.s32.totalorder %s16, 0
      %p104 = por %p102, %p103
      %p105 = scmp.ne.s32.totalorder %s97, %s99
      %p106 = scmp.eq.s32.totalorder %s21, 1
      %p107 = por %p105, %p106
      %p108 = scmp.ne.s32.totalorder %s99, %s100
      %p109 = scmp.eq.s32.totalorder %s21, 0
      %p110 = por %p108, %p109
      %p111 = scmp.ne.s32.totalorder %s99, %s100
      %p112 = scmp.eq.s32.totalorder %s22, 1
      %p113 = por %p111, %p112
      %p115 = scmp.ne.s32.totalorder %s100, %s114
      %p116 = scmp.eq.s32.totalorder %s22, 0
      %p117 = por %p115, %p116
      %s119 = sadd.s32 %s118, 1
      %p122 = scmp.eq.s32.totalorder %s16, 1
      %p123 = scmp.ne.s32.totalorder %s118, %s120
      %p124 = scmp.eq.s32.totalorder %s16, 0
      %p125 = por %p123, %p124
      %p126 = scmp.ne.s32.totalorder %s118, %s120
      %p127 = scmp.eq.s32.totalorder %s21, 1
      %p128 = por %p126, %p127
      %p129 = scmp.ne.s32.totalorder %s120, %s121
      %p130 = scmp.eq.s32.totalorder %s21, 0
      %p131 = por %p129, %p130
      %p132 = scmp.ne.s32.totalorder %s120, %s121
      %p133 = scmp.eq.s32.totalorder %s22, 1
      %p134 = por %p132, %p133
      %p136 = scmp.ne.s32.totalorder %s121, %s135
      %p137 = scmp.eq.s32.totalorder %s22, 0
      %p138 = por %p136, %p137
      %s140 = sadd.s32 %s139, 1
      %p143 = scmp.eq.s32.totalorder %s16, 1
      %p144 = scmp.ne.s32.totalorder %s139, %s141
      %p145 = scmp.eq.s32.totalorder %s16, 0
      %p146 = por %p144, %p145
      %p147 = scmp.ne.s32.totalorder %s139, %s141
      %p148 = scmp.eq.s32.totalorder %s21, 1
      %p149 = por %p147, %p148
      %p150 = scmp.ne.s32.totalorder %s141, %s142
      %p151 = scmp.eq.s32.totalorder %s21, 0
      %p152 = por %p150, %p151
      %p153 = scmp.ne.s32.totalorder %s141, %s142
      %p154 = scmp.eq.s32.totalorder %s22, 1
      %p155 = por %p153, %p154
      %p157 = scmp.ne.s32.totalorder %s142, %s156
      %p158 = scmp.eq.s32.totalorder %s22, 0
      %p159 = por %p157, %p158
      %s161 = sadd.s32 %s160, 1
      %p164 = scmp.eq.s32.totalorder %s16, 1
      %p165 = scmp.ne.s32.totalorder %s160, %s162
      %p166 = scmp.eq.s32.totalorder %s16, 0
      %p167 = por %p165, %p166
      %p168 = scmp.ne.s32.totalorder %s160, %s162
      %p169 = scmp.eq.s32.totalorder %s21, 1
      %p170 = por %p168, %p169
      %p171 = scmp.ne.s32.totalorder %s162, %s163
      %p172 = scmp.eq.s32.totalorder %s21, 0
      %p173 = por %p171, %p172
      %p174 = scmp.ne.s32.totalorder %s162, %s163
      %p175 = scmp.eq.s32.totalorder %s22, 1
      %p176 = por %p174, %p175
      %p178 = scmp.ne.s32.totalorder %s163, %s177
      %p179 = scmp.eq.s32.totalorder %s22, 0
      %p180 = por %p178, %p179
      %s182 = sadd.s32 %s181, 1
      %p185 = scmp.eq.s32.totalorder %s16, 1
      %p186 = scmp.ne.s32.totalorder %s181, %s183
      %p187 = scmp.eq.s32.totalorder %s16, 0
      %p188 = por %p186, %p187
      %p189 = scmp.ne.s32.totalorder %s181, %s183
      %p190 = scmp.eq.s32.totalorder %s21, 1
      %p191 = por %p189, %p190
      %p192 = scmp.ne.s32.totalorder %s183, %s184
      %p193 = scmp.eq.s32.totalorder %s21, 0
      %p194 = por %p192, %p193
      %p195 = scmp.ne.s32.totalorder %s183, %s184
      %p196 = scmp.eq.s32.totalorder %s22, 1
      %p197 = por %p195, %p196
      %p199 = scmp.ne.s32.totalorder %s184, %s198
      %p200 = scmp.eq.s32.totalorder %s22, 0
      %p201 = por %p199, %p200
      %s203 = sadd.s32 %s202, 1
      %p206 = scmp.eq.s32.totalorder %s16, 1
      %p207 = scmp.ne.s32.totalorder %s202, %s204
      %p208 = scmp.eq.s32.totalorder %s16, 0
      %p209 = por %p207, %p208
      %p210 = scmp.ne.s32.totalorder %s202, %s204
      %p211 = scmp.eq.s32.totalorder %s21, 1
      %p212 = por %p210, %p211
      %p213 = scmp.ne.s32.totalorder %s204, %s205
      %p214 = scmp.eq.s32.totalorder %s21, 0
      %p215 = por %p213, %p214
      %p216 = scmp.ne.s32.totalorder %s204, %s205
      %p217 = scmp.eq.s32.totalorder %s22, 1
      %p218 = por %p216, %p217
      %p220 = scmp.ne.s32.totalorder %s205, %s219
      %p221 = scmp.eq.s32.totalorder %s22, 0
      %p222 = por %p220, %p221
      %s223 = ssub.s32 %s16, %s23
      %p224 = scmp.eq.s32.totalorder %s223, 0
      %s226 = sadd.s32 %s225, 1
      %s227 = scalar_select %p224, %s225, %s226
      %p230 = pneg %p224
      %p231 = scmp.eq.s32.totalorder %s16, 1
      %p232 = por %p230, %p231
      %p233 = scmp.ne.s32.totalorder %s225, %s228
      %p234 = scmp.eq.s32.totalorder %s16, 0
      %p235 = por %p233, %p234
      %p236 = scmp.ne.s32.totalorder %s225, %s228
      %p237 = scmp.eq.s32.totalorder %s21, 1
      %p238 = por %p236, %p237
      %p239 = scmp.ne.s32.totalorder %s228, %s229
      %p240 = scmp.eq.s32.totalorder %s21, 0
      %p241 = por %p239, %p240
      %p242 = scmp.ne.s32.totalorder %s228, %s229
      %p243 = scmp.eq.s32.totalorder %s22, 1
      %p244 = por %p242, %p243
      %p246 = scmp.ne.s32.totalorder %s229, %s245
      %p247 = scmp.eq.s32.totalorder %s22, 0
      %p248 = por %p246, %p247
      %p249 = scmp.le.s32.totalorder 1, %s16
      %p250 = scmp.lt.s32.totalorder %s16, 3
      %p251 = pnand %p249, %p250
      %p252 = pneg %p251
      // Predicated region
      $region9: #{tpu_custom_call.1} parent=5 // pred_check
        _
      $region10: #{tpu_custom_call.1} parent=5 // pred_check_branch
        %254 = sbr.rel (%p251) target = $region12
      $region11: #{tpu_custom_call.1} parent=5 // pred_region
        %s255 = ssub.s32 %s16, 1
        // Predicated region
        $region13: #{tpu_custom_call.1} parent=11 // pred_check
          %p256 = pneg %p37
        $region14: #{tpu_custom_call.1} parent=11 // pred_check_branch
          %258 = sbr.rel (%p256) target = $region16
        $region15: #{tpu_custom_call.1} parent=11 // pred_region
          %s260 = ssub.s32 16, 16
          %261 = vsyncadd [#allocation3], %s260
          %s263 = sshll.u32 %s0, 4
          %s264 = int_to_ptr.vmem [resolvable:$true] %s263
          %266 = dma.vmem_to_smem %s264, 16, [#allocation2], [#allocation3]
        $region16: #{tpu_custom_call.1} parent=11 // pred_fallthru
          _
        // Predicated region
        $region17: #{tpu_custom_call.1} parent=11 // pred_check
          %p267 = pneg %p110
        $region18: #{tpu_custom_call.1} parent=11 // pred_check_branch
          %269 = sbr.rel (%p267) target = $region20
        $region19: #{tpu_custom_call.1} parent=11 // pred_region
          _
        $region20: #{tpu_custom_call.1} parent=11 // pred_fallthru
          _
        // Predicated region
        $region21: #{tpu_custom_call.1} parent=11 // pred_check
          %p270 = pneg %p131
        $region22: #{tpu_custom_call.1} parent=11 // pred_check_branch
          %272 = sbr.rel (%p270) target = $region24
        $region23: #{tpu_custom_call.1} parent=11 // pred_region
          _
        $region24: #{tpu_custom_call.1} parent=11 // pred_fallthru
          _
        // Predicated region
        $region25: #{tpu_custom_call.1} parent=11 // pred_check
          %p273 = pneg %p152
        $region26: #{tpu_custom_call.1} parent=11 // pred_check_branch
          %275 = sbr.rel (%p273) target = $region28
        $region27: #{tpu_custom_call.1} parent=11 // pred_region
          _
        $region28: #{tpu_custom_call.1} parent=11 // pred_fallthru
          _
        // Predicated region
        $region29: #{tpu_custom_call.1} parent=11 // pred_check
          %p276 = pneg %p173
        $region30: #{tpu_custom_call.1} parent=11 // pred_check_branch
          %278 = sbr.rel (%p276) target = $region32
        $region31: #{tpu_custom_call.1} parent=11 // pred_region
          _
        $region32: #{tpu_custom_call.1} parent=11 // pred_fallthru
          _
        // Predicated region
        $region33: #{tpu_custom_call.1} parent=11 // pred_check
          %p279 = pneg %p194
        $region34: #{tpu_custom_call.1} parent=11 // pred_check_branch
          %281 = sbr.rel (%p279) target = $region36
        $region35: #{tpu_custom_call.1} parent=11 // pred_region
          _
        $region36: #{tpu_custom_call.1} parent=11 // pred_fallthru
          _
        // Predicated region
        $region37: #{tpu_custom_call.1} parent=11 // pred_check
          %p282 = pneg %p215
        $region38: #{tpu_custom_call.1} parent=11 // pred_check_branch
          %284 = sbr.rel (%p282) target = $region40
        $region39: #{tpu_custom_call.1} parent=11 // pred_region
          _
        $region40: #{tpu_custom_call.1} parent=11 // pred_fallthru
          _
      $region12: #{tpu_custom_call.1} parent=5 // pred_fallthru
        _
      %p285 = scmp.lt.s32.totalorder %s16, 2
      // Predicated region
      $region41: #{tpu_custom_call.1} parent=5 // pred_check
        %p286 = pneg %p285
      $region42: #{tpu_custom_call.1} parent=5 // pred_check_branch
        %288 = sbr.rel (%p286) target = $region44
      $region43: #{tpu_custom_call.1} parent=5 // pred_region
        // Predicated region
        $region45: #{tpu_custom_call.1} parent=43 // pred_check
          %p289 = pneg %p57
        $region46: #{tpu_custom_call.1} parent=43 // pred_check_branch
          %291 = sbr.rel (%p289) target = $region48
        $region47: #{tpu_custom_call.1} parent=43 // pred_region
          %p292 = scmp.lt.s32.totalorder %s16, 1
          %s293 = scalar_select %p292, %s16, 1
          %s294 = smul.addr %s293, 8
          %s295 = smul.addr %s294, 8
          %s296 = scalar_lea.vmem %s1, %s295
        $region48: #{tpu_custom_call.1} parent=43 // pred_fallthru
          _
        // Predicated region
        $region49: #{tpu_custom_call.1} parent=43 // pred_check
          %p297 = pneg %p83
        $region50: #{tpu_custom_call.1} parent=43 // pred_check_branch
          %299 = sbr.rel (%p297) target = $region52
        $region51: #{tpu_custom_call.1} parent=43 // pred_region
          %p300 = scmp.lt.s32.totalorder %s16, 1
          %s301 = scalar_select %p300, %s16, 1
          %s302 = smul.addr %s301, 8
          %s303 = smul.addr %s302, 8
          %s304 = scalar_lea.vmem %s2, %s303
        $region52: #{tpu_custom_call.1} parent=43 // pred_fallthru
          _
      $region44: #{tpu_custom_call.1} parent=5 // pred_fallthru
        _
      %p305 = scmp.le.s32.totalorder 1, %s16
      %p306 = scmp.lt.s32.totalorder %s16, 3
      %p307 = pnand %p305, %p306
      %p308 = pneg %p307
      // Predicated region
      $region53: #{tpu_custom_call.1} parent=5 // pred_check
        _
      $region54: #{tpu_custom_call.1} parent=5 // pred_check_branch
        %310 = sbr.rel (%p307) target = $region56
      $region55: #{tpu_custom_call.1} parent=5 // pred_region
        %s311 = ssub.s32 %s16, 1
        // Predicated region
        $region57: #{tpu_custom_call.1} parent=55 // pred_check
          %p312 = pneg %p37
        $region58: #{tpu_custom_call.1} parent=55 // pred_check_branch
          %314 = sbr.rel (%p312) target = $region60
        $region59: #{tpu_custom_call.1} parent=55 // pred_region
          %315 = dma.done [#allocation3], 16
        $region60: #{tpu_custom_call.1} parent=55 // pred_fallthru
          _
        %316 = sfence
        %p317 = pneg %p37
        %p318 = pneg %p34
        %p319 = scmp.lt.s32.totalorder %s21, 1
        %s320 = scalar_select %p319, %s21, 1
        %s321 = smul.addr %s320, 8
        %s322 = smul.addr %s321, 8
        %s323 = scalar_lea.vmem %s1, %s322
        %p324 = pneg %p63
        %p325 = pneg %p60
        %p326 = scmp.lt.s32.totalorder %s21, 1
        %s327 = scalar_select %p326, %s21, 1
        %s328 = smul.addr %s327, 8
        %s329 = smul.addr %s328, 8
        %s330 = scalar_lea.vmem %s2, %s329
        %p331 = pneg %p89
        %p332 = pneg %p86
        %p333 = pneg %p110
        %p334 = pneg %p107
        %p335 = pneg %p131
        %p336 = pneg %p128
        %p337 = pneg %p152
        %p338 = pneg %p149
        %p339 = pneg %p173
        %p340 = pneg %p170
        %p341 = pneg %p194
        %p342 = pneg %p191
        %p343 = pneg %p215
        %p344 = pneg %p212
        %p345 = pneg %p241
        %p346 = pneg %p238
        %p347 = scmp.lt.s32.totalorder %s21, 1
        %s348 = scalar_select %p347, %s21, 1
        %s349 = smul.addr %s348, 8
        %s350 = scalar_lea.vmem %s9, %s349
        %p351 = scmp.lt.s32.totalorder %s21, 1
        %s352 = scalar_select %p351, %s21, 1
        %s353 = smul.addr %s352, 8
        %s354 = smul.addr %s353, 8
        %s355 = scalar_lea.vmem %s1, %s354
        %p356 = scmp.lt.s32.totalorder %s21, 1
        %s357 = scalar_select %p356, %s21, 1
        %s358 = smul.addr %s357, 8
        %s359 = smul.addr %s358, 8
        %s360 = scalar_lea.vmem %s2, %s359
        %p361 = scmp.lt.s32.totalorder %s21, 1
        %s362 = scalar_select %p361, %s21, 1
        %s363 = smul.addr %s362, 8
        %s364 = scalar_lea.vmem %s9, %s363
        %s365 = sld [smem:[#allocation2]]
        %s366 = sld [smem:[#allocation2 + $0x1]]
        %v367 = vld [vmem:[%s355] sm:$0xff]
        %v368 = vld [vmem:[%s355 + $0x8] sm:$0xff]
        %v369 = vld [vmem:[%s355 + $0x10] sm:$0xff]
        %v370 = vld [vmem:[%s355 + $0x18] sm:$0xff]
        %v371 = vld [vmem:[%s355 + $0x20] sm:$0xff]
        %v372 = vld [vmem:[%s355 + $0x28] sm:$0xff]
        %v373 = vld [vmem:[%s355 + $0x30] sm:$0xff]
        %v374 = vld [vmem:[%s355 + $0x38] sm:$0xff]
        %v375 = vld [vmem:[%s360] sm:$0xff]
        %v376 = vld [vmem:[%s360 + $0x8] sm:$0xff]
        %v377 = vld [vmem:[%s360 + $0x10] sm:$0xff]
        %v378 = vld [vmem:[%s360 + $0x18] sm:$0xff]
        %v379 = vld [vmem:[%s360 + $0x20] sm:$0xff]
        %v380 = vld [vmem:[%s360 + $0x28] sm:$0xff]
        %v381 = vld [vmem:[%s360 + $0x30] sm:$0xff]
        %v382 = vld [vmem:[%s360 + $0x38] sm:$0xff]
        %v383 = vld [vmem:[%s3] sm:$0xff]
        %v384 = vld [vmem:[%s3 + $0x8] sm:$0xff]
        %v385 = vld [vmem:[%s3 + $0x10] sm:$0xff]
        %v386 = vld [vmem:[%s3 + $0x18] sm:$0xff]
        %v387 = vld [vmem:[%s3 + $0x20] sm:$0xff]
        %v388 = vld [vmem:[%s3 + $0x28] sm:$0xff]
        %v389 = vld [vmem:[%s3 + $0x30] sm:$0xff]
        %v390 = vld [vmem:[%s3 + $0x38] sm:$0xff]
        %v391 = vld [vmem:[%s3 + $0x40] sm:$0xff]
        %v392 = vld [vmem:[%s3 + $0x48] sm:$0xff]
        %v393 = vld [vmem:[%s3 + $0x50] sm:$0xff]
        %v394 = vld [vmem:[%s3 + $0x58] sm:$0xff]
        %v395 = vld [vmem:[%s3 + $0x60] sm:$0xff]
        %v396 = vld [vmem:[%s3 + $0x68] sm:$0xff]
        %v397 = vld [vmem:[%s3 + $0x70] sm:$0xff]
        %v398 = vld [vmem:[%s3 + $0x78] sm:$0xff]
        %v399 = vld [vmem:[%s3 + $0x80] sm:$0xff]
        %v400 = vld [vmem:[%s3 + $0x88] sm:$0xff]
        %v401 = vld [vmem:[%s3 + $0x90] sm:$0xff]
        %v402 = vld [vmem:[%s3 + $0x98] sm:$0xff]
        %v403 = vld [vmem:[%s3 + $0xa0] sm:$0xff]
        %v404 = vld [vmem:[%s3 + $0xa8] sm:$0xff]
        %v405 = vld [vmem:[%s3 + $0xb0] sm:$0xff]
        %v406 = vld [vmem:[%s3 + $0xb8] sm:$0xff]
        %v407 = vld [vmem:[%s3 + $0xc0] sm:$0xff]
        %v408 = vld [vmem:[%s3 + $0xc8] sm:$0xff]
        %v409 = vld [vmem:[%s3 + $0xd0] sm:$0xff]
        %v410 = vld [vmem:[%s3 + $0xd8] sm:$0xff]
        %v411 = vld [vmem:[%s3 + $0xe0] sm:$0xff]
        %v412 = vld [vmem:[%s3 + $0xe8] sm:$0xff]
        %v413 = vld [vmem:[%s3 + $0xf0] sm:$0xff]
        %v414 = vld [vmem:[%s3 + $0xf8] sm:$0xff]
        %v415 = vld [vmem:[%s3 + $0x100] sm:$0xff]
        %v416 = vld [vmem:[%s3 + $0x108] sm:$0xff]
        %v417 = vld [vmem:[%s3 + $0x110] sm:$0xff]
        %v418 = vld [vmem:[%s3 + $0x118] sm:$0xff]
        %v419 = vld [vmem:[%s3 + $0x120] sm:$0xff]
        %v420 = vld [vmem:[%s3 + $0x128] sm:$0xff]
        %v421 = vld [vmem:[%s3 + $0x130] sm:$0xff]
        %v422 = vld [vmem:[%s3 + $0x138] sm:$0xff]
        %v423 = vld [vmem:[%s3 + $0x140] sm:$0xff]
        %v424 = vld [vmem:[%s3 + $0x148] sm:$0xff]
        %v425 = vld [vmem:[%s3 + $0x150] sm:$0xff]
        %v426 = vld [vmem:[%s3 + $0x158] sm:$0xff]
        %v427 = vld [vmem:[%s3 + $0x160] sm:$0xff]
        %v428 = vld [vmem:[%s3 + $0x168] sm:$0xff]
        %v429 = vld [vmem:[%s3 + $0x170] sm:$0xff]
        %v430 = vld [vmem:[%s3 + $0x178] sm:$0xff]
        %v431 = vld [vmem:[%s3 + $0x180] sm:$0xff]
        %v432 = vld [vmem:[%s3 + $0x188] sm:$0xff]
        %v433 = vld [vmem:[%s3 + $0x190] sm:$0xff]
        %v434 = vld [vmem:[%s3 + $0x198] sm:$0xff]
        %v435 = vld [vmem:[%s3 + $0x1a0] sm:$0xff]
        %v436 = vld [vmem:[%s3 + $0x1a8] sm:$0xff]
        %v437 = vld [vmem:[%s3 + $0x1b0] sm:$0xff]
        %v438 = vld [vmem:[%s3 + $0x1b8] sm:$0xff]
        %v439 = vld [vmem:[%s3 + $0x1c0] sm:$0xff]
        %v440 = vld [vmem:[%s3 + $0x1c8] sm:$0xff]
        %v441 = vld [vmem:[%s3 + $0x1d0] sm:$0xff]
        %v442 = vld [vmem:[%s3 + $0x1d8] sm:$0xff]
        %v443 = vld [vmem:[%s3 + $0x1e0] sm:$0xff]
        %v444 = vld [vmem:[%s3 + $0x1e8] sm:$0xff]
        %v445 = vld [vmem:[%s3 + $0x1f0] sm:$0xff]
        %v446 = vld [vmem:[%s3 + $0x1f8] sm:$0xff]
        %v447 = vld [vmem:[%s3 + $0x200] sm:$0xff]
        %v448 = vld [vmem:[%s3 + $0x208] sm:$0xff]
        %v449 = vld [vmem:[%s3 + $0x210] sm:$0xff]
        %v450 = vld [vmem:[%s3 + $0x218] sm:$0xff]
        %v451 = vld [vmem:[%s3 + $0x220] sm:$0xff]
        %v452 = vld [vmem:[%s3 + $0x228] sm:$0xff]
        %v453 = vld [vmem:[%s3 + $0x230] sm:$0xff]
        %v454 = vld [vmem:[%s3 + $0x238] sm:$0xff]
        %v455 = vld [vmem:[%s3 + $0x240] sm:$0xff]
        %v456 = vld [vmem:[%s3 + $0x248] sm:$0xff]
        %v457 = vld [vmem:[%s3 + $0x250] sm:$0xff]
        %v458 = vld [vmem:[%s3 + $0x258] sm:$0xff]
        %v459 = vld [vmem:[%s3 + $0x260] sm:$0xff]
        %v460 = vld [vmem:[%s3 + $0x268] sm:$0xff]
        %v461 = vld [vmem:[%s3 + $0x270] sm:$0xff]
        %v462 = vld [vmem:[%s3 + $0x278] sm:$0xff]
        %v463 = vld [vmem:[%s3 + $0x280] sm:$0xff]
        %v464 = vld [vmem:[%s3 + $0x288] sm:$0xff]
        %v465 = vld [vmem:[%s3 + $0x290] sm:$0xff]
        %v466 = vld [vmem:[%s3 + $0x298] sm:$0xff]
        %v467 = vld [vmem:[%s3 + $0x2a0] sm:$0xff]
        %v468 = vld [vmem:[%s3 + $0x2a8] sm:$0xff]
        %v469 = vld [vmem:[%s3 + $0x2b0] sm:$0xff]
        %v470 = vld [vmem:[%s3 + $0x2b8] sm:$0xff]
        %v471 = vld [vmem:[%s3 + $0x2c0] sm:$0xff]
        %v472 = vld [vmem:[%s3 + $0x2c8] sm:$0xff]
        %v473 = vld [vmem:[%s3 + $0x2d0] sm:$0xff]
        %v474 = vld [vmem:[%s3 + $0x2d8] sm:$0xff]
        %v475 = vld [vmem:[%s3 + $0x2e0] sm:$0xff]
        %v476 = vld [vmem:[%s3 + $0x2e8] sm:$0xff]
        %v477 = vld [vmem:[%s3 + $0x2f0] sm:$0xff]
        %v478 = vld [vmem:[%s3 + $0x2f8] sm:$0xff]
        %v479 = vld [vmem:[%s3 + $0x300] sm:$0xff]
        %v480 = vld [vmem:[%s3 + $0x308] sm:$0xff]
        %v481 = vld [vmem:[%s3 + $0x310] sm:$0xff]
        %v482 = vld [vmem:[%s3 + $0x318] sm:$0xff]
        %v483 = vld [vmem:[%s3 + $0x320] sm:$0xff]
        %v484 = vld [vmem:[%s3 + $0x328] sm:$0xff]
        %v485 = vld [vmem:[%s3 + $0x330] sm:$0xff]
        %v486 = vld [vmem:[%s3 + $0x338] sm:$0xff]
        %v487 = vld [vmem:[%s3 + $0x340] sm:$0xff]
        %v488 = vld [vmem:[%s3 + $0x348] sm:$0xff]
        %v489 = vld [vmem:[%s3 + $0x350] sm:$0xff]
        %v490 = vld [vmem:[%s3 + $0x358] sm:$0xff]
        %v491 = vld [vmem:[%s3 + $0x360] sm:$0xff]
        %v492 = vld [vmem:[%s3 + $0x368] sm:$0xff]
        %v493 = vld [vmem:[%s3 + $0x370] sm:$0xff]
        %v494 = vld [vmem:[%s3 + $0x378] sm:$0xff]
        %v495 = vld [vmem:[%s3 + $0x380] sm:$0xff]
        %v496 = vld [vmem:[%s3 + $0x388] sm:$0xff]
        %v497 = vld [vmem:[%s3 + $0x390] sm:$0xff]
        %v498 = vld [vmem:[%s3 + $0x398] sm:$0xff]
        %v499 = vld [vmem:[%s3 + $0x3a0] sm:$0xff]
        %v500 = vld [vmem:[%s3 + $0x3a8] sm:$0xff]
        %v501 = vld [vmem:[%s3 + $0x3b0] sm:$0xff]
        %v502 = vld [vmem:[%s3 + $0x3b8] sm:$0xff]
        %v503 = vld [vmem:[%s3 + $0x3c0] sm:$0xff]
        %v504 = vld [vmem:[%s3 + $0x3c8] sm:$0xff]
        %v505 = vld [vmem:[%s3 + $0x3d0] sm:$0xff]
        %v506 = vld [vmem:[%s3 + $0x3d8] sm:$0xff]
        %v507 = vld [vmem:[%s3 + $0x3e0] sm:$0xff]
        %v508 = vld [vmem:[%s3 + $0x3e8] sm:$0xff]
        %v509 = vld [vmem:[%s3 + $0x3f0] sm:$0xff]
        %v510 = vld [vmem:[%s3 + $0x3f8] sm:$0xff]
        %v511 = vld [vmem:[%s4] sm:$0x1]
        %v513 = vlaneseq
        %v514 = vshrl.u32 %v513, 7
        %v515 = vsub.s32 0, %v514
        %v516 = vrot.slane %v511, %v515
        %518 = vmatprep.subr.mxu0 0.0
        %519 = vmatpush1.msra.mxu0 %v383
        %520 = vmatprep.subr.mxu0 0.0
        %521 = vmatpush1.msra.mxu0 %v384
        %522 = vmatprep.subr.mxu0 0.0
        %523 = vmatpush1.msra.mxu0 %v385
        %524 = vmatprep.subr.mxu0 0.0
        %525 = vmatpush1.msra.mxu0 %v386
        %526 = vmatprep.subr.mxu0 0.0
        %527 = vmatpush1.msra.mxu0 %v387
        %528 = vmatprep.subr.mxu0 0.0
        %529 = vmatpush1.msra.mxu0 %v388
        %530 = vmatprep.subr.mxu0 0.0
        %531 = vmatpush1.msra.mxu0 %v389
        %532 = vmatprep.subr.mxu0 0.0
        %533 = vmatpush1.msra.mxu0 %v390
        %534 = vmatprep.subr.mxu0 0.0
        %535 = vmatpush1.msra.mxu0 %v391
        %536 = vmatprep.subr.mxu0 0.0
        %537 = vmatpush1.msra.mxu0 %v392
        %538 = vmatprep.subr.mxu0 0.0
        %539 = vmatpush1.msra.mxu0 %v393
        %540 = vmatprep.subr.mxu0 0.0
        %541 = vmatpush1.msra.mxu0 %v394
        %542 = vmatprep.subr.mxu0 0.0
        %543 = vmatpush1.msra.mxu0 %v395
        %544 = vmatprep.subr.mxu0 0.0
        %545 = vmatpush1.msra.mxu0 %v396
        %546 = vmatprep.subr.mxu0 0.0
        %547 = vmatpush1.msra.mxu0 %v397
        %548 = vmatprep.subr.mxu0 0.0
        %549 = vmatpush1.msra.mxu0 %v398
        %550 = vmatprep.subr.mxu0 0.0
        %551 = vmatpush1.msra.mxu0 %v399
        %552 = vmatprep.subr.mxu0 0.0
        %553 = vmatpush1.msra.mxu0 %v400
        %554 = vmatprep.subr.mxu0 0.0
        %555 = vmatpush1.msra.mxu0 %v401
        %556 = vmatprep.subr.mxu0 0.0
        %557 = vmatpush1.msra.mxu0 %v402
        %558 = vmatprep.subr.mxu0 0.0
        %559 = vmatpush1.msra.mxu0 %v403
        %560 = vmatprep.subr.mxu0 0.0
        %561 = vmatpush1.msra.mxu0 %v404
        %562 = vmatprep.subr.mxu0 0.0
        %563 = vmatpush1.msra.mxu0 %v405
        %564 = vmatprep.subr.mxu0 0.0
        %565 = vmatpush1.msra.mxu0 %v406
        %566 = vmatprep.subr.mxu0 0.0
        %567 = vmatpush1.msra.mxu0 %v407
        %568 = vmatprep.subr.mxu0 0.0
        %569 = vmatpush1.msra.mxu0 %v408
        %570 = vmatprep.subr.mxu0 0.0
        %571 = vmatpush1.msra.mxu0 %v409
        %572 = vmatprep.subr.mxu0 0.0
        %573 = vmatpush1.msra.mxu0 %v410
        %574 = vmatprep.subr.mxu0 0.0
        %575 = vmatpush1.msra.mxu0 %v411
        %576 = vmatprep.subr.mxu0 0.0
        %577 = vmatpush1.msra.mxu0 %v412
        %578 = vmatprep.subr.mxu0 0.0
        %579 = vmatpush1.msra.mxu0 %v413
        %580 = vmatprep.subr.mxu0 0.0
        %581 = vmatpush1.msra.mxu0 %v414
        %582 = vmatprep.mubr.f32.mxu0 %v368
        %583 = vmatmul.mubr.f32.gmra.mrb[0].mxu0 %v367
        %v584 = vpop.f32.mrb[0].mxu0
        %v585 = vadd.f32 %v516, %v584
        %v586 = vpop.f32.mrb[0].mxu0
        %587 = vdwg.mxu0
        %588 = vmatprep.subr.mxu0 0.0
        %589 = vmatpush1.msra.mxu0 %v415
        %590 = vmatprep.subr.mxu0 0.0
        %591 = vmatpush1.msra.mxu0 %v416
        %592 = vmatprep.subr.mxu0 0.0
        %593 = vmatpush1.msra.mxu0 %v417
        %594 = vmatprep.subr.mxu0 0.0
        %595 = vmatpush1.msra.mxu0 %v418
        %596 = vmatprep.subr.mxu0 0.0
        %597 = vmatpush1.msra.mxu0 %v419
        %598 = vmatprep.subr.mxu0 0.0
        %599 = vmatpush1.msra.mxu0 %v420
        %600 = vmatprep.subr.mxu0 0.0
        %601 = vmatpush1.msra.mxu0 %v421
        %602 = vmatprep.subr.mxu0 0.0
        %603 = vmatpush1.msra.mxu0 %v422
        %604 = vmatprep.subr.mxu0 0.0
        %605 = vmatpush1.msra.mxu0 %v423
        %606 = vmatprep.subr.mxu0 0.0
        %607 = vmatpush1.msra.mxu0 %v424
        %608 = vmatprep.subr.mxu0 0.0
        %609 = vmatpush1.msra.mxu0 %v425
        %610 = vmatprep.subr.mxu0 0.0
        %611 = vmatpush1.msra.mxu0 %v426
        %612 = vmatprep.subr.mxu0 0.0
        %613 = vmatpush1.msra.mxu0 %v427
        %614 = vmatprep.subr.mxu0 0.0
        %615 = vmatpush1.msra.mxu0 %v428
        %616 = vmatprep.subr.mxu0 0.0
        %617 = vmatpush1.msra.mxu0 %v429
        %618 = vmatprep.subr.mxu0 0.0
        %619 = vmatpush1.msra.mxu0 %v430
        %620 = vmatprep.subr.mxu0 0.0
        %621 = vmatpush1.msra.mxu0 %v431
        %622 = vmatprep.subr.mxu0 0.0
        %623 = vmatpush1.msra.mxu0 %v432
        %624 = vmatprep.subr.mxu0 0.0
        %625 = vmatpush1.msra.mxu0 %v433
        %626 = vmatprep.subr.mxu0 0.0
        %627 = vmatpush1.msra.mxu0 %v434
        %628 = vmatprep.subr.mxu0 0.0
        %629 = vmatpush1.msra.mxu0 %v435
        %630 = vmatprep.subr.mxu0 0.0
        %631 = vmatpush1.msra.mxu0 %v436
        %632 = vmatprep.subr.mxu0 0.0
        %633 = vmatpush1.msra.mxu0 %v437
        %634 = vmatprep.subr.mxu0 0.0
        %635 = vmatpush1.msra.mxu0 %v438
        %636 = vmatprep.subr.mxu0 0.0
        %637 = vmatpush1.msra.mxu0 %v439
        %638 = vmatprep.subr.mxu0 0.0
        %639 = vmatpush1.msra.mxu0 %v440
        %640 = vmatprep.subr.mxu0 0.0
        %641 = vmatpush1.msra.mxu0 %v441
        %642 = vmatprep.subr.mxu0 0.0
        %643 = vmatpush1.msra.mxu0 %v442
        %644 = vmatprep.subr.mxu0 0.0
        %645 = vmatpush1.msra.mxu0 %v443
        %646 = vmatprep.subr.mxu0 0.0
        %647 = vmatpush1.msra.mxu0 %v444
        %648 = vmatprep.subr.mxu0 0.0
        %649 = vmatpush1.msra.mxu0 %v445
        %650 = vmatprep.subr.mxu0 0.0
        %651 = vmatpush1.msra.mxu0 %v446
        %652 = vmatprep.mubr.f32.mxu0 %v370
        %653 = vmatmul.mubr.f32.gmra.mrb[0].mxu0 %v369
        %v654 = vpop.f32.mrb[0].mxu0
        %v655 = vadd.f32 %v585, %v654
        %v656 = vpop.f32.mrb[0].mxu0
        %657 = vdwg.mxu0
        %658 = vmatprep.subr.mxu0 0.0
        %659 = vmatpush1.msra.mxu0 %v447
        %660 = vmatprep.subr.mxu0 0.0
        %661 = vmatpush1.msra.mxu0 %v448
        %662 = vmatprep.subr.mxu0 0.0
        %663 = vmatpush1.msra.mxu0 %v449
        %664 = vmatprep.subr.mxu0 0.0
        %665 = vmatpush1.msra.mxu0 %v450
        %666 = vmatprep.subr.mxu0 0.0
        %667 = vmatpush1.msra.mxu0 %v451
        %668 = vmatprep.subr.mxu0 0.0
        %669 = vmatpush1.msra.mxu0 %v452
        %670 = vmatprep.subr.mxu0 0.0
        %671 = vmatpush1.msra.mxu0 %v453
        %672 = vmatprep.subr.mxu0 0.0
        %673 = vmatpush1.msra.mxu0 %v454
        %674 = vmatprep.subr.mxu0 0.0
        %675 = vmatpush1.msra.mxu0 %v455
        %676 = vmatprep.subr.mxu0 0.0
        %677 = vmatpush1.msra.mxu0 %v456
        %678 = vmatprep.subr.mxu0 0.0
        %679 = vmatpush1.msra.mxu0 %v457
        %680 = vmatprep.subr.mxu0 0.0
        %681 = vmatpush1.msra.mxu0 %v458
        %682 = vmatprep.subr.mxu0 0.0
        %683 = vmatpush1.msra.mxu0 %v459
        %684 = vmatprep.subr.mxu0 0.0
        %685 = vmatpush1.msra.mxu0 %v460
        %686 = vmatprep.subr.mxu0 0.0
        %687 = vmatpush1.msra.mxu0 %v461
        %688 = vmatprep.subr.mxu0 0.0
        %689 = vmatpush1.msra.mxu0 %v462
        %690 = vmatprep.subr.mxu0 0.0
        %691 = vmatpush1.msra.mxu0 %v463
        %692 = vmatprep.subr.mxu0 0.0
        %693 = vmatpush1.msra.mxu0 %v464
        %694 = vmatprep.subr.mxu0 0.0
        %695 = vmatpush1.msra.mxu0 %v465
        %696 = vmatprep.subr.mxu0 0.0
        %697 = vmatpush1.msra.mxu0 %v466
        %698 = vmatprep.subr.mxu0 0.0
        %699 = vmatpush1.msra.mxu0 %v467
        %700 = vmatprep.subr.mxu0 0.0
        %701 = vmatpush1.msra.mxu0 %v468
        %702 = vmatprep.subr.mxu0 0.0
        %703 = vmatpush1.msra.mxu0 %v469
        %704 = vmatprep.subr.mxu0 0.0
        %705 = vmatpush1.msra.mxu0 %v470
        %706 = vmatprep.subr.mxu0 0.0
        %707 = vmatpush1.msra.mxu0 %v471
        %708 = vmatprep.subr.mxu0 0.0
        %709 = vmatpush1.msra.mxu0 %v472
        %710 = vmatprep.subr.mxu0 0.0
        %711 = vmatpush1.msra.mxu0 %v473
        %712 = vmatprep.subr.mxu0 0.0
        %713 = vmatpush1.msra.mxu0 %v474
        %714 = vmatprep.subr.mxu0 0.0
        %715 = vmatpush1.msra.mxu0 %v475
        %716 = vmatprep.subr.mxu0 0.0
        %717 = vmatpush1.msra.mxu0 %v476
        %718 = vmatprep.subr.mxu0 0.0
        %719 = vmatpush1.msra.mxu0 %v477
        %720 = vmatprep.subr.mxu0 0.0
        %721 = vmatpush1.msra.mxu0 %v478
        %722 = vmatprep.mubr.f32.mxu0 %v372
        %723 = vmatmul.mubr.f32.gmra.mrb[0].mxu0 %v371
        %v724 = vpop.f32.mrb[0].mxu0
        %v725 = vadd.f32 %v655, %v724
        %v726 = vpop.f32.mrb[0].mxu0
        %727 = vdwg.mxu0
        %728 = vmatprep.subr.mxu0 0.0
        %729 = vmatpush1.msra.mxu0 %v479
        %730 = vmatprep.subr.mxu0 0.0
        %731 = vmatpush1.msra.mxu0 %v480
        %732 = vmatprep.subr.mxu0 0.0
        %733 = vmatpush1.msra.mxu0 %v481
        %734 = vmatprep.subr.mxu0 0.0
        %735 = vmatpush1.msra.mxu0 %v482
        %736 = vmatprep.subr.mxu0 0.0
        %737 = vmatpush1.msra.mxu0 %v483
        %738 = vmatprep.subr.mxu0 0.0
        %739 = vmatpush1.msra.mxu0 %v484
        %740 = vmatprep.subr.mxu0 0.0
        %741 = vmatpush1.msra.mxu0 %v485
        %742 = vmatprep.subr.mxu0 0.0
        %743 = vmatpush1.msra.mxu0 %v486
        %744 = vmatprep.subr.mxu0 0.0
        %745 = vmatpush1.msra.mxu0 %v487
        %746 = vmatprep.subr.mxu0 0.0
        %747 = vmatpush1.msra.mxu0 %v488
        %748 = vmatprep.subr.mxu0 0.0
        %749 = vmatpush1.msra.mxu0 %v489
        %750 = vmatprep.subr.mxu0 0.0
        %751 = vmatpush1.msra.mxu0 %v490
        %752 = vmatprep.subr.mxu0 0.0
        %753 = vmatpush1.msra.mxu0 %v491
        %754 = vmatprep.subr.mxu0 0.0
        %755 = vmatpush1.msra.mxu0 %v492
        %756 = vmatprep.subr.mxu0 0.0
        %757 = vmatpush1.msra.mxu0 %v493
        %758 = vmatprep.subr.mxu0 0.0
        %759 = vmatpush1.msra.mxu0 %v494
        %760 = vmatprep.subr.mxu0 0.0
        %761 = vmatpush1.msra.mxu0 %v495
        %762 = vmatprep.subr.mxu0 0.0
        %763 = vmatpush1.msra.mxu0 %v496
        %764 = vmatprep.subr.mxu0 0.0
        %765 = vmatpush1.msra.mxu0 %v497
        %766 = vmatprep.subr.mxu0 0.0
        %767 = vmatpush1.msra.mxu0 %v498
        %768 = vmatprep.subr.mxu0 0.0
        %769 = vmatpush1.msra.mxu0 %v499
        %770 = vmatprep.subr.mxu0 0.0
        %771 = vmatpush1.msra.mxu0 %v500
        %772 = vmatprep.subr.mxu0 0.0
        %773 = vmatpush1.msra.mxu0 %v501
        %774 = vmatprep.subr.mxu0 0.0
        %775 = vmatpush1.msra.mxu0 %v502
        %776 = vmatprep.subr.mxu0 0.0
        %777 = vmatpush1.msra.mxu0 %v503
        %778 = vmatprep.subr.mxu0 0.0
        %779 = vmatpush1.msra.mxu0 %v504
        %780 = vmatprep.subr.mxu0 0.0
        %781 = vmatpush1.msra.mxu0 %v505
        %782 = vmatprep.subr.mxu0 0.0
        %783 = vmatpush1.msra.mxu0 %v506
        %784 = vmatprep.subr.mxu0 0.0
        %785 = vmatpush1.msra.mxu0 %v507
        %786 = vmatprep.subr.mxu0 0.0
        %787 = vmatpush1.msra.mxu0 %v508
        %788 = vmatprep.subr.mxu0 0.0
        %789 = vmatpush1.msra.mxu0 %v509
        %790 = vmatprep.subr.mxu0 0.0
        %791 = vmatpush1.msra.mxu0 %v510
        %792 = vmatprep.mubr.f32.mxu0 %v374
        %793 = vmatmul.mubr.f32.gmra.mrb[0].mxu0 %v373
        %v794 = vpop.f32.mrb[0].mxu0
        %v795 = vadd.f32 %v725, %v794
        %v796 = vpop.f32.mrb[0].mxu0
        %797 = vdwg.mxu0
        %v798 = vmax.f32 %v795, 0.0
        %v799 = vld [vmem:[%s5] sm:$0x1]
        %v801 = vlaneseq
        %v802 = vshrl.u32 %v801, 7
        %v803 = vsub.s32 0, %v802
        %v804 = vrot.slane %v799, %v803
        %v806 = vmul.f32 %v798, %v804
        %vm807 = vcmask 261120
        %v808 = vsel %vm807, %v806, 0.0
        %809 = vadd.xlane.f32.xlu0 %v808
        %v810 = vpop.xlane.xlu0 %809
        %v811 = vld [vmem:[%s6] sm:$0xff]
        %v812 = vld [vmem:[%s6 + $0x8] sm:$0xff]
        %v813 = vld [vmem:[%s6 + $0x10] sm:$0xff]
        %v814 = vld [vmem:[%s6 + $0x18] sm:$0xff]
        %v815 = vld [vmem:[%s6 + $0x20] sm:$0xff]
        %v816 = vld [vmem:[%s6 + $0x28] sm:$0xff]
        %v817 = vld [vmem:[%s6 + $0x30] sm:$0xff]
        %v818 = vld [vmem:[%s6 + $0x38] sm:$0xff]
        %v819 = vld [vmem:[%s6 + $0x40] sm:$0xff]
        %v820 = vld [vmem:[%s6 + $0x48] sm:$0xff]
        %v821 = vld [vmem:[%s6 + $0x50] sm:$0xff]
        %v822 = vld [vmem:[%s6 + $0x58] sm:$0xff]
        %v823 = vld [vmem:[%s6 + $0x60] sm:$0xff]
        %v824 = vld [vmem:[%s6 + $0x68] sm:$0xff]
        %v825 = vld [vmem:[%s6 + $0x70] sm:$0xff]
        %v826 = vld [vmem:[%s6 + $0x78] sm:$0xff]
        %v827 = vld [vmem:[%s6 + $0x80] sm:$0xff]
        %v828 = vld [vmem:[%s6 + $0x88] sm:$0xff]
        %v829 = vld [vmem:[%s6 + $0x90] sm:$0xff]
        %v830 = vld [vmem:[%s6 + $0x98] sm:$0xff]
        %v831 = vld [vmem:[%s6 + $0xa0] sm:$0xff]
        %v832 = vld [vmem:[%s6 + $0xa8] sm:$0xff]
        %v833 = vld [vmem:[%s6 + $0xb0] sm:$0xff]
        %v834 = vld [vmem:[%s6 + $0xb8] sm:$0xff]
        %v835 = vld [vmem:[%s6 + $0xc0] sm:$0xff]
        %v836 = vld [vmem:[%s6 + $0xc8] sm:$0xff]
        %v837 = vld [vmem:[%s6 + $0xd0] sm:$0xff]
        %v838 = vld [vmem:[%s6 + $0xd8] sm:$0xff]
        %v839 = vld [vmem:[%s6 + $0xe0] sm:$0xff]
        %v840 = vld [vmem:[%s6 + $0xe8] sm:$0xff]
        %v841 = vld [vmem:[%s6 + $0xf0] sm:$0xff]
        %v842 = vld [vmem:[%s6 + $0xf8] sm:$0xff]
        %v843 = vld [vmem:[%s6 + $0x100] sm:$0xff]
        %v844 = vld [vmem:[%s6 + $0x108] sm:$0xff]
        %v845 = vld [vmem:[%s6 + $0x110] sm:$0xff]
        %v846 = vld [vmem:[%s6 + $0x118] sm:$0xff]
        %v847 = vld [vmem:[%s6 + $0x120] sm:$0xff]
        %v848 = vld [vmem:[%s6 + $0x128] sm:$0xff]
        %v849 = vld [vmem:[%s6 + $0x130] sm:$0xff]
        %v850 = vld [vmem:[%s6 + $0x138] sm:$0xff]
        %v851 = vld [vmem:[%s6 + $0x140] sm:$0xff]
        %v852 = vld [vmem:[%s6 + $0x148] sm:$0xff]
        %v853 = vld [vmem:[%s6 + $0x150] sm:$0xff]
        %v854 = vld [vmem:[%s6 + $0x158] sm:$0xff]
        %v855 = vld [vmem:[%s6 + $0x160] sm:$0xff]
        %v856 = vld [vmem:[%s6 + $0x168] sm:$0xff]
        %v857 = vld [vmem:[%s6 + $0x170] sm:$0xff]
        %v858 = vld [vmem:[%s6 + $0x178] sm:$0xff]
        %v859 = vld [vmem:[%s6 + $0x180] sm:$0xff]
        %v860 = vld [vmem:[%s6 + $0x188] sm:$0xff]
        %v861 = vld [vmem:[%s6 + $0x190] sm:$0xff]
        %v862 = vld [vmem:[%s6 + $0x198] sm:$0xff]
        %v863 = vld [vmem:[%s6 + $0x1a0] sm:$0xff]
        %v864 = vld [vmem:[%s6 + $0x1a8] sm:$0xff]
        %v865 = vld [vmem:[%s6 + $0x1b0] sm:$0xff]
        %v866 = vld [vmem:[%s6 + $0x1b8] sm:$0xff]
        %v867 = vld [vmem:[%s6 + $0x1c0] sm:$0xff]
        %v868 = vld [vmem:[%s6 + $0x1c8] sm:$0xff]
        %v869 = vld [vmem:[%s6 + $0x1d0] sm:$0xff]
        %v870 = vld [vmem:[%s6 + $0x1d8] sm:$0xff]
        %v871 = vld [vmem:[%s6 + $0x1e0] sm:$0xff]
        %v872 = vld [vmem:[%s6 + $0x1e8] sm:$0xff]
        %v873 = vld [vmem:[%s6 + $0x1f0] sm:$0xff]
        %v874 = vld [vmem:[%s6 + $0x1f8] sm:$0xff]
        %v875 = vld [vmem:[%s6 + $0x200] sm:$0xff]
        %v876 = vld [vmem:[%s6 + $0x208] sm:$0xff]
        %v877 = vld [vmem:[%s6 + $0x210] sm:$0xff]
        %v878 = vld [vmem:[%s6 + $0x218] sm:$0xff]
        %v879 = vld [vmem:[%s6 + $0x220] sm:$0xff]
        %v880 = vld [vmem:[%s6 + $0x228] sm:$0xff]
        %v881 = vld [vmem:[%s6 + $0x230] sm:$0xff]
        %v882 = vld [vmem:[%s6 + $0x238] sm:$0xff]
        %v883 = vld [vmem:[%s6 + $0x240] sm:$0xff]
        %v884 = vld [vmem:[%s6 + $0x248] sm:$0xff]
        %v885 = vld [vmem:[%s6 + $0x250] sm:$0xff]
        %v886 = vld [vmem:[%s6 + $0x258] sm:$0xff]
        %v887 = vld [vmem:[%s6 + $0x260] sm:$0xff]
        %v888 = vld [vmem:[%s6 + $0x268] sm:$0xff]
        %v889 = vld [vmem:[%s6 + $0x270] sm:$0xff]
        %v890 = vld [vmem:[%s6 + $0x278] sm:$0xff]
        %v891 = vld [vmem:[%s6 + $0x280] sm:$0xff]
        %v892 = vld [vmem:[%s6 + $0x288] sm:$0xff]
        %v893 = vld [vmem:[%s6 + $0x290] sm:$0xff]
        %v894 = vld [vmem:[%s6 + $0x298] sm:$0xff]
        %v895 = vld [vmem:[%s6 + $0x2a0] sm:$0xff]
        %v896 = vld [vmem:[%s6 + $0x2a8] sm:$0xff]
        %v897 = vld [vmem:[%s6 + $0x2b0] sm:$0xff]
        %v898 = vld [vmem:[%s6 + $0x2b8] sm:$0xff]
        %v899 = vld [vmem:[%s6 + $0x2c0] sm:$0xff]
        %v900 = vld [vmem:[%s6 + $0x2c8] sm:$0xff]
        %v901 = vld [vmem:[%s6 + $0x2d0] sm:$0xff]
        %v902 = vld [vmem:[%s6 + $0x2d8] sm:$0xff]
        %v903 = vld [vmem:[%s6 + $0x2e0] sm:$0xff]
        %v904 = vld [vmem:[%s6 + $0x2e8] sm:$0xff]
        %v905 = vld [vmem:[%s6 + $0x2f0] sm:$0xff]
        %v906 = vld [vmem:[%s6 + $0x2f8] sm:$0xff]
        %v907 = vld [vmem:[%s6 + $0x300] sm:$0xff]
        %v908 = vld [vmem:[%s6 + $0x308] sm:$0xff]
        %v909 = vld [vmem:[%s6 + $0x310] sm:$0xff]
        %v910 = vld [vmem:[%s6 + $0x318] sm:$0xff]
        %v911 = vld [vmem:[%s6 + $0x320] sm:$0xff]
        %v912 = vld [vmem:[%s6 + $0x328] sm:$0xff]
        %v913 = vld [vmem:[%s6 + $0x330] sm:$0xff]
        %v914 = vld [vmem:[%s6 + $0x338] sm:$0xff]
        %v915 = vld [vmem:[%s6 + $0x340] sm:$0xff]
        %v916 = vld [vmem:[%s6 + $0x348] sm:$0xff]
        %v917 = vld [vmem:[%s6 + $0x350] sm:$0xff]
        %v918 = vld [vmem:[%s6 + $0x358] sm:$0xff]
        %v919 = vld [vmem:[%s6 + $0x360] sm:$0xff]
        %v920 = vld [vmem:[%s6 + $0x368] sm:$0xff]
        %v921 = vld [vmem:[%s6 + $0x370] sm:$0xff]
        %v922 = vld [vmem:[%s6 + $0x378] sm:$0xff]
        %v923 = vld [vmem:[%s6 + $0x380] sm:$0xff]
        %v924 = vld [vmem:[%s6 + $0x388] sm:$0xff]
        %v925 = vld [vmem:[%s6 + $0x390] sm:$0xff]
        %v926 = vld [vmem:[%s6 + $0x398] sm:$0xff]
        %v927 = vld [vmem:[%s6 + $0x3a0] sm:$0xff]
        %v928 = vld [vmem:[%s6 + $0x3a8] sm:$0xff]
        %v929 = vld [vmem:[%s6 + $0x3b0] sm:$0xff]
        %v930 = vld [vmem:[%s6 + $0x3b8] sm:$0xff]
        %v931 = vld [vmem:[%s6 + $0x3c0] sm:$0xff]
        %v932 = vld [vmem:[%s6 + $0x3c8] sm:$0xff]
        %v933 = vld [vmem:[%s6 + $0x3d0] sm:$0xff]
        %v934 = vld [vmem:[%s6 + $0x3d8] sm:$0xff]
        %v935 = vld [vmem:[%s6 + $0x3e0] sm:$0xff]
        %v936 = vld [vmem:[%s6 + $0x3e8] sm:$0xff]
        %v937 = vld [vmem:[%s6 + $0x3f0] sm:$0xff]
        %v938 = vld [vmem:[%s6 + $0x3f8] sm:$0xff]
        %v939 = vld [vmem:[%s7] sm:$0x1]
        %v941 = vlaneseq
        %v942 = vshrl.u32 %v941, 7
        %v943 = vsub.s32 0, %v942
        %v944 = vrot.slane %v939, %v943
        %946 = vmatprep.subr.mxu0 0.0
        %947 = vmatpush1.msra.mxu0 %v811
        %948 = vmatprep.subr.mxu0 0.0
        %949 = vmatpush1.msra.mxu0 %v812
        %950 = vmatprep.subr.mxu0 0.0
        %951 = vmatpush1.msra.mxu0 %v813
        %952 = vmatprep.subr.mxu0 0.0
        %953 = vmatpush1.msra.mxu0 %v814
        %954 = vmatprep.subr.mxu0 0.0
        %955 = vmatpush1.msra.mxu0 %v815
        %956 = vmatprep.subr.mxu0 0.0
        %957 = vmatpush1.msra.mxu0 %v816
        %958 = vmatprep.subr.mxu0 0.0
        %959 = vmatpush1.msra.mxu0 %v817
        %960 = vmatprep.subr.mxu0 0.0
        %961 = vmatpush1.msra.mxu0 %v818
        %962 = vmatprep.subr.mxu0 0.0
        %963 = vmatpush1.msra.mxu0 %v819
        %964 = vmatprep.subr.mxu0 0.0
        %965 = vmatpush1.msra.mxu0 %v820
        %966 = vmatprep.subr.mxu0 0.0
        %967 = vmatpush1.msra.mxu0 %v821
        %968 = vmatprep.subr.mxu0 0.0
        %969 = vmatpush1.msra.mxu0 %v822
        %970 = vmatprep.subr.mxu0 0.0
        %971 = vmatpush1.msra.mxu0 %v823
        %972 = vmatprep.subr.mxu0 0.0
        %973 = vmatpush1.msra.mxu0 %v824
        %974 = vmatprep.subr.mxu0 0.0
        %975 = vmatpush1.msra.mxu0 %v825
        %976 = vmatprep.subr.mxu0 0.0
        %977 = vmatpush1.msra.mxu0 %v826
        %978 = vmatprep.subr.mxu0 0.0
        %979 = vmatpush1.msra.mxu0 %v827
        %980 = vmatprep.subr.mxu0 0.0
        %981 = vmatpush1.msra.mxu0 %v828
        %982 = vmatprep.subr.mxu0 0.0
        %983 = vmatpush1.msra.mxu0 %v829
        %984 = vmatprep.subr.mxu0 0.0
        %985 = vmatpush1.msra.mxu0 %v830
        %986 = vmatprep.subr.mxu0 0.0
        %987 = vmatpush1.msra.mxu0 %v831
        %988 = vmatprep.subr.mxu0 0.0
        %989 = vmatpush1.msra.mxu0 %v832
        %990 = vmatprep.subr.mxu0 0.0
        %991 = vmatpush1.msra.mxu0 %v833
        %992 = vmatprep.subr.mxu0 0.0
        %993 = vmatpush1.msra.mxu0 %v834
        %994 = vmatprep.subr.mxu0 0.0
        %995 = vmatpush1.msra.mxu0 %v835
        %996 = vmatprep.subr.mxu0 0.0
        %997 = vmatpush1.msra.mxu0 %v836
        %998 = vmatprep.subr.mxu0 0.0
        %999 = vmatpush1.msra.mxu0 %v837
        %1000 = vmatprep.subr.mxu0 0.0
        %1001 = vmatpush1.msra.mxu0 %v838
        %1002 = vmatprep.subr.mxu0 0.0
        %1003 = vmatpush1.msra.mxu0 %v839
        %1004 = vmatprep.subr.mxu0 0.0
        %1005 = vmatpush1.msra.mxu0 %v840
        %1006 = vmatprep.subr.mxu0 0.0
        %1007 = vmatpush1.msra.mxu0 %v841
        %1008 = vmatprep.subr.mxu0 0.0
        %1009 = vmatpush1.msra.mxu0 %v842
        %1010 = vmatprep.mubr.f32.mxu0 %v376
        %1011 = vmatmul.mubr.f32.gmra.mrb[0].mxu0 %v375
        %v1012 = vpop.f32.mrb[0].mxu0
        %v1013 = vadd.f32 %v944, %v1012
        %v1014 = vpop.f32.mrb[0].mxu0
        %1015 = vdwg.mxu0
        %1016 = vmatprep.subr.mxu0 0.0
        %1017 = vmatpush1.msra.mxu0 %v843
        %1018 = vmatprep.subr.mxu0 0.0
        %1019 = vmatpush1.msra.mxu0 %v844
        %1020 = vmatprep.subr.mxu0 0.0
        %1021 = vmatpush1.msra.mxu0 %v845
        %1022 = vmatprep.subr.mxu0 0.0
        %1023 = vmatpush1.msra.mxu0 %v846
        %1024 = vmatprep.subr.mxu0 0.0
        %1025 = vmatpush1.msra.mxu0 %v847
        %1026 = vmatprep.subr.mxu0 0.0
        %1027 = vmatpush1.msra.mxu0 %v848
        %1028 = vmatprep.subr.mxu0 0.0
        %1029 = vmatpush1.msra.mxu0 %v849
        %1030 = vmatprep.subr.mxu0 0.0
        %1031 = vmatpush1.msra.mxu0 %v850
        %1032 = vmatprep.subr.mxu0 0.0
        %1033 = vmatpush1.msra.mxu0 %v851
        %1034 = vmatprep.subr.mxu0 0.0
        %1035 = vmatpush1.msra.mxu0 %v852
        %1036 = vmatprep.subr.mxu0 0.0
        %1037 = vmatpush1.msra.mxu0 %v853
        %1038 = vmatprep.subr.mxu0 0.0
        %1039 = vmatpush1.msra.mxu0 %v854
        %1040 = vmatprep.subr.mxu0 0.0
        %1041 = vmatpush1.msra.mxu0 %v855
        %1042 = vmatprep.subr.mxu0 0.0
        %1043 = vmatpush1.msra.mxu0 %v856
        %1044 = vmatprep.subr.mxu0 0.0
        %1045 = vmatpush1.msra.mxu0 %v857
        %1046 = vmatprep.subr.mxu0 0.0
        %1047 = vmatpush1.msra.mxu0 %v858
        %1048 = vmatprep.subr.mxu0 0.0
        %1049 = vmatpush1.msra.mxu0 %v859
        %1050 = vmatprep.subr.mxu0 0.0
        %1051 = vmatpush1.msra.mxu0 %v860
        %1052 = vmatprep.subr.mxu0 0.0
        %1053 = vmatpush1.msra.mxu0 %v861
        %1054 = vmatprep.subr.mxu0 0.0
        %1055 = vmatpush1.msra.mxu0 %v862
        %1056 = vmatprep.subr.mxu0 0.0
        %1057 = vmatpush1.msra.mxu0 %v863
        %1058 = vmatprep.subr.mxu0 0.0
        %1059 = vmatpush1.msra.mxu0 %v864
        %1060 = vmatprep.subr.mxu0 0.0
        %1061 = vmatpush1.msra.mxu0 %v865
        %1062 = vmatprep.subr.mxu0 0.0
        %1063 = vmatpush1.msra.mxu0 %v866
        %1064 = vmatprep.subr.mxu0 0.0
        %1065 = vmatpush1.msra.mxu0 %v867
        %1066 = vmatprep.subr.mxu0 0.0
        %1067 = vmatpush1.msra.mxu0 %v868
        %1068 = vmatprep.subr.mxu0 0.0
        %1069 = vmatpush1.msra.mxu0 %v869
        %1070 = vmatprep.subr.mxu0 0.0
        %1071 = vmatpush1.msra.mxu0 %v870
        %1072 = vmatprep.subr.mxu0 0.0
        %1073 = vmatpush1.msra.mxu0 %v871
        %1074 = vmatprep.subr.mxu0 0.0
        %1075 = vmatpush1.msra.mxu0 %v872
        %1076 = vmatprep.subr.mxu0 0.0
        %1077 = vmatpush1.msra.mxu0 %v873
        %1078 = vmatprep.subr.mxu0 0.0
        %1079 = vmatpush1.msra.mxu0 %v874
        %1080 = vmatprep.mubr.f32.mxu0 %v378
        %1081 = vmatmul.mubr.f32.gmra.mrb[0].mxu0 %v377
        %v1082 = vpop.f32.mrb[0].mxu0
        %v1083 = vadd.f32 %v1013, %v1082
        %v1084 = vpop.f32.mrb[0].mxu0
        %1085 = vdwg.mxu0
        %1086 = vmatprep.subr.mxu0 0.0
        %1087 = vmatpush1.msra.mxu0 %v875
        %1088 = vmatprep.subr.mxu0 0.0
        %1089 = vmatpush1.msra.mxu0 %v876
        %1090 = vmatprep.subr.mxu0 0.0
        %1091 = vmatpush1.msra.mxu0 %v877
        %1092 = vmatprep.subr.mxu0 0.0
        %1093 = vmatpush1.msra.mxu0 %v878
        %1094 = vmatprep.subr.mxu0 0.0
        %1095 = vmatpush1.msra.mxu0 %v879
        %1096 = vmatprep.subr.mxu0 0.0
        %1097 = vmatpush1.msra.mxu0 %v880
        %1098 = vmatprep.subr.mxu0 0.0
        %1099 = vmatpush1.msra.mxu0 %v881
        %1100 = vmatprep.subr.mxu0 0.0
        %1101 = vmatpush1.msra.mxu0 %v882
        %1102 = vmatprep.subr.mxu0 0.0
        %1103 = vmatpush1.msra.mxu0 %v883
        %1104 = vmatprep.subr.mxu0 0.0
        %1105 = vmatpush1.msra.mxu0 %v884
        %1106 = vmatprep.subr.mxu0 0.0
        %1107 = vmatpush1.msra.mxu0 %v885
        %1108 = vmatprep.subr.mxu0 0.0
        %1109 = vmatpush1.msra.mxu0 %v886
        %1110 = vmatprep.subr.mxu0 0.0
        %1111 = vmatpush1.msra.mxu0 %v887
        %1112 = vmatprep.subr.mxu0 0.0
        %1113 = vmatpush1.msra.mxu0 %v888
        %1114 = vmatprep.subr.mxu0 0.0
        %1115 = vmatpush1.msra.mxu0 %v889
        %1116 = vmatprep.subr.mxu0 0.0
        %1117 = vmatpush1.msra.mxu0 %v890
        %1118 = vmatprep.subr.mxu0 0.0
        %1119 = vmatpush1.msra.mxu0 %v891
        %1120 = vmatprep.subr.mxu0 0.0
        %1121 = vmatpush1.msra.mxu0 %v892
        %1122 = vmatprep.subr.mxu0 0.0
        %1123 = vmatpush1.msra.mxu0 %v893
        %1124 = vmatprep.subr.mxu0 0.0
        %1125 = vmatpush1.msra.mxu0 %v894
        %1126 = vmatprep.subr.mxu0 0.0
        %1127 = vmatpush1.msra.mxu0 %v895
        %1128 = vmatprep.subr.mxu0 0.0
        %1129 = vmatpush1.msra.mxu0 %v896
        %1130 = vmatprep.subr.mxu0 0.0
        %1131 = vmatpush1.msra.mxu0 %v897
        %1132 = vmatprep.subr.mxu0 0.0
        %1133 = vmatpush1.msra.mxu0 %v898
        %1134 = vmatprep.subr.mxu0 0.0
        %1135 = vmatpush1.msra.mxu0 %v899
        %1136 = vmatprep.subr.mxu0 0.0
        %1137 = vmatpush1.msra.mxu0 %v900
        %1138 = vmatprep.subr.mxu0 0.0
        %1139 = vmatpush1.msra.mxu0 %v901
        %1140 = vmatprep.subr.mxu0 0.0
        %1141 = vmatpush1.msra.mxu0 %v902
        %1142 = vmatprep.subr.mxu0 0.0
        %1143 = vmatpush1.msra.mxu0 %v903
        %1144 = vmatprep.subr.mxu0 0.0
        %1145 = vmatpush1.msra.mxu0 %v904
        %1146 = vmatprep.subr.mxu0 0.0
        %1147 = vmatpush1.msra.mxu0 %v905
        %1148 = vmatprep.subr.mxu0 0.0
        %1149 = vmatpush1.msra.mxu0 %v906
        %1150 = vmatprep.mubr.f32.mxu0 %v380
        %1151 = vmatmul.mubr.f32.gmra.mrb[0].mxu0 %v379
        %v1152 = vpop.f32.mrb[0].mxu0
        %v1153 = vadd.f32 %v1083, %v1152
        %v1154 = vpop.f32.mrb[0].mxu0
        %1155 = vdwg.mxu0
        %1156 = vmatprep.subr.mxu0 0.0
        %1157 = vmatpush1.msra.mxu0 %v907
        %1158 = vmatprep.subr.mxu0 0.0
        %1159 = vmatpush1.msra.mxu0 %v908
        %1160 = vmatprep.subr.mxu0 0.0
        %1161 = vmatpush1.msra.mxu0 %v909
        %1162 = vmatprep.subr.mxu0 0.0
        %1163 = vmatpush1.msra.mxu0 %v910
        %1164 = vmatprep.subr.mxu0 0.0
        %1165 = vmatpush1.msra.mxu0 %v911
        %1166 = vmatprep.subr.mxu0 0.0
        %1167 = vmatpush1.msra.mxu0 %v912
        %1168 = vmatprep.subr.mxu0 0.0
        %1169 = vmatpush1.msra.mxu0 %v913
        %1170 = vmatprep.subr.mxu0 0.0
        %1171 = vmatpush1.msra.mxu0 %v914
        %1172 = vmatprep.subr.mxu0 0.0
        %1173 = vmatpush1.msra.mxu0 %v915
        %1174 = vmatprep.subr.mxu0 0.0
        %1175 = vmatpush1.msra.mxu0 %v916
        %1176 = vmatprep.subr.mxu0 0.0
        %1177 = vmatpush1.msra.mxu0 %v917
        %1178 = vmatprep.subr.mxu0 0.0
        %1179 = vmatpush1.msra.mxu0 %v918
        %1180 = vmatprep.subr.mxu0 0.0
        %1181 = vmatpush1.msra.mxu0 %v919
        %1182 = vmatprep.subr.mxu0 0.0
        %1183 = vmatpush1.msra.mxu0 %v920
        %1184 = vmatprep.subr.mxu0 0.0
        %1185 = vmatpush1.msra.mxu0 %v921
        %1186 = vmatprep.subr.mxu0 0.0
        %1187 = vmatpush1.msra.mxu0 %v922
        %1188 = vmatprep.subr.mxu0 0.0
        %1189 = vmatpush1.msra.mxu0 %v923
        %1190 = vmatprep.subr.mxu0 0.0
        %1191 = vmatpush1.msra.mxu0 %v924
        %1192 = vmatprep.subr.mxu0 0.0
        %1193 = vmatpush1.msra.mxu0 %v925
        %1194 = vmatprep.subr.mxu0 0.0
        %1195 = vmatpush1.msra.mxu0 %v926
        %1196 = vmatprep.subr.mxu0 0.0
        %1197 = vmatpush1.msra.mxu0 %v927
        %1198 = vmatprep.subr.mxu0 0.0
        %1199 = vmatpush1.msra.mxu0 %v928
        %1200 = vmatprep.subr.mxu0 0.0
        %1201 = vmatpush1.msra.mxu0 %v929
        %1202 = vmatprep.subr.mxu0 0.0
        %1203 = vmatpush1.msra.mxu0 %v930
        %1204 = vmatprep.subr.mxu0 0.0
        %1205 = vmatpush1.msra.mxu0 %v931
        %1206 = vmatprep.subr.mxu0 0.0
        %1207 = vmatpush1.msra.mxu0 %v932
        %1208 = vmatprep.subr.mxu0 0.0
        %1209 = vmatpush1.msra.mxu0 %v933
        %1210 = vmatprep.subr.mxu0 0.0
        %1211 = vmatpush1.msra.mxu0 %v934
        %1212 = vmatprep.subr.mxu0 0.0
        %1213 = vmatpush1.msra.mxu0 %v935
        %1214 = vmatprep.subr.mxu0 0.0
        %1215 = vmatpush1.msra.mxu0 %v936
        %1216 = vmatprep.subr.mxu0 0.0
        %1217 = vmatpush1.msra.mxu0 %v937
        %1218 = vmatprep.subr.mxu0 0.0
        %1219 = vmatpush1.msra.mxu0 %v938
        %1220 = vmatprep.mubr.f32.mxu0 %v382
        %1221 = vmatmul.mubr.f32.gmra.mrb[0].mxu0 %v381
        %v1222 = vpop.f32.mrb[0].mxu0
        %v1223 = vadd.f32 %v1153, %v1222
        %v1224 = vpop.f32.mrb[0].mxu0
        %1225 = vdwg.mxu0
        %v1226 = vmax.f32 %v1223, 0.0
        %v1227 = vld [vmem:[%s8] sm:$0x1]
        %v1229 = vlaneseq
        %v1230 = vshrl.u32 %v1229, 7
        %v1231 = vsub.s32 0, %v1230
        %v1232 = vrot.slane %v1227, %v1231
        %v1234 = vmul.f32 %v1226, %v1232
        %v1235 = vsel %vm807, %v1234, 0.0
        %1236 = vadd.xlane.f32.xlu0 %v1235
        %v1237 = vpop.xlane.xlu0 %1236
        %v1238 = vsub.f32 %v367, %v375
        %v1239 = vsub.f32 %v368, %v376
        %v1240 = vsub.f32 %v369, %v377
        %v1241 = vsub.f32 %v370, %v378
        %v1242 = vsub.f32 %v371, %v379
        %v1243 = vsub.f32 %v372, %v380
        %v1244 = vsub.f32 %v373, %v381
        %v1245 = vsub.f32 %v374, %v382
        %v1246 = vmul.f32 %v1238, %v1238
        %v1247 = vmul.f32 %v1239, %v1239
        %v1248 = vmul.f32 %v1240, %v1240
        %v1249 = vmul.f32 %v1241, %v1241
        %v1250 = vmul.f32 %v1242, %v1242
        %v1251 = vmul.f32 %v1243, %v1243
        %v1252 = vmul.f32 %v1244, %v1244
        %v1253 = vmul.f32 %v1245, %v1245
        %v1254 = vadd.f32 %v1246, %v1247
        %v1255 = vadd.f32 %v1254, %v1248
        %v1256 = vadd.f32 %v1255, %v1249
        %v1257 = vadd.f32 %v1256, %v1250
        %v1258 = vadd.f32 %v1257, %v1251
        %v1259 = vadd.f32 %v1258, %v1252
        %v1260 = vadd.f32 %v1259, %v1253
        %1261 = vadd.xlane.f32.xlu0 %v1260
        %v1262 = vpop.xlane.xlu0 %1261
        %v1263 = vadd.f32 %v810, %v1237
        %v1264 = vsub.f32 %v1263, %v1262
        %v1265 = vstv %s365
        %v1266 = vmul.f32 %v1265, %v1264
        %v1267 = vstv %s366
        %v1268 = vadd.f32 %v1266, %v1267
        %v1269 = vmul.f32 %v1268, 1.442695
        %v1270 = vpow.pop %v1269
        %vm1271 = vcmask 7168
        %1272 = vst.msk [vmem:[%s364] sm:$0xff] %vm1271, %v1270
        %p1273 = scmp.lt.s32.totalorder %s21, 1
        %s1274 = scalar_select %p1273, %s21, 1
        %s1275 = smul.addr %s1274, 8
        %s1276 = scalar_lea.vmem %s9, %s1275
        // Predicated region
        $region61: #{tpu_custom_call.1} parent=55 // pred_check
          %p1277 = pneg %p238
        $region62: #{tpu_custom_call.1} parent=55 // pred_check_branch
          %1279 = sbr.rel (%p1277) target = $region64
        $region63: #{tpu_custom_call.1} parent=55 // pred_region
          _
        $region64: #{tpu_custom_call.1} parent=55 // pred_fallthru
          _
      $region56: #{tpu_custom_call.1} parent=5 // pred_fallthru
        _
      %p1280 = scmp.le.s32.totalorder 2, %s16
      // Predicated region
      $region65: #{tpu_custom_call.1} parent=5 // pred_check
        %p1281 = pneg %p1280
      $region66: #{tpu_custom_call.1} parent=5 // pred_check_branch
        %1283 = sbr.rel (%p1281) target = $region68
      $region67: #{tpu_custom_call.1} parent=5 // pred_region
        %s1284 = ssub.s32 %s16, 2
        // Predicated region
        $region69: #{tpu_custom_call.1} parent=67 // pred_check
          %p1285 = pneg %p244
        $region70: #{tpu_custom_call.1} parent=67 // pred_check_branch
          %1287 = sbr.rel (%p1285) target = $region72
        $region71: #{tpu_custom_call.1} parent=67 // pred_region
          %p1288 = scmp.lt.s32.totalorder %s22, 1
          %s1289 = scalar_select %p1288, %s22, 1
          %s1290 = smul.addr %s1289, 8
          %s1291 = scalar_lea.vmem %s9, %s1290
        $region72: #{tpu_custom_call.1} parent=67 // pred_fallthru
          _
      $region68: #{tpu_custom_call.1} parent=5 // pred_fallthru
        _
    $region6: #{tpu_custom_call.1} parent=1 // loop_footer
      %s20 = sadd.s32 1, %s16
    $region7: #{tpu_custom_call.1} parent=1 // loop_footer_branch
      %15 = sbr.rel target = $region3
    $region8: #{tpu_custom_call.1} parent=1 // loop_exit
      _
    %1292 = vsyncpa [#allocation3], 1
    %s1293 = scalar_lea.sflag [#allocation3], 1
    %1294 = vsyncpa %s1293, 1

</llo_original>
